<compile_context>
chip_gen: v7x
topology: tpu7x:2x2x1
jax: 0.10.0
libtpu: 0.0.40
codegen_flags: <defaults>
</compile_context>

<pallas_src>
import functools

import jax
import jax.numpy as jnp
from jax.experimental import pallas as pl
from jax.experimental.pallas import tpu as pltpu


def _softplus(x):
    # Stable single-branch softplus: max(x,0) + log1p(exp(-|x|)).
    # (One exp + one log1p per element on the EUP; no dual-branch select.)
    return jnp.maximum(x, 0.0) + jnp.log1p(jnp.exp(-jnp.abs(x)))


def _ff_likelihood_kernel(x_ref, w1_ref, b1_ref, w2_ref, b2_ref,
                          loc_ref, scale_ref):
    E = loc_ref.shape[-1]

    # Layer 1: cast the f32 input tile to bf16 on the VPU (hidden under the MXU),
    # bf16 MXU matmul with f32 accumulation, f32 bias add + ReLU.
    x_mm = x_ref[...].astype(w1_ref.dtype)
    h = jnp.dot(x_mm, w1_ref[...],
                preferred_element_type=jnp.float32) + b1_ref[...]
    h = jnp.maximum(h, 0.0)

    # Layer 2: single fused GEMM against the full [H, 2E] weight (fills the
    # 256-wide MXU on v6e/v7x). Split the f32 accumulator at column E=128:
    # a static, vreg-aligned slice -> both stores stay unmasked lane-dense.
    out = jnp.dot(h.astype(w2_ref.dtype), w2_ref[...],
                  preferred_element_type=jnp.float32) + b2_ref[...]
    loc = out[:, :E]
    raw = out[:, E:]

    loc_ref[...] = loc.astype(loc_ref.dtype)
    scale_ref[...] = _softplus(raw).astype(scale_ref.dtype)


def prepare_params(w1, b1, w2, b2, mm_dtype=jnp.bfloat16):
    """One-time parameter prep (call once at init, NOT per forward):
    matmul weights -> bf16, biases -> f32. Keeps the per-call path free of
    extra HBM passes re-casting f32 weights."""
    return (w1.astype(mm_dtype), b1.astype(jnp.float32),
            w2.astype(mm_dtype), b2.astype(jnp.float32))


@functools.partial(jax.jit,
                   static_argnames=("event_size", "block_b", "out_dtype"))
def fully_factorized_likelihood(inputs, w1_mm, b1, w2_mm, b2, event_size,
                                block_b=256, out_dtype=jnp.float32):
    """Returns (loc, scale) of the fully-factorized Normal P(x|z).

    inputs: [B, D_in] (f32); w1_mm: [D_in, H] (bf16); b1: [1, H] (f32);
    w2_mm: [H, 2*E] (bf16); b2: [1, 2*E] (f32).  Use prepare_params() once
    to produce the bf16/f32 parameter set from f32 torch-style weights.
    """
    B, d_in = inputs.shape
    H = w1_mm.shape[1]
    E = event_size
    assert w2_mm.shape == (H, 2 * E) and b2.shape == (1, 2 * E)

    tb = min(block_b, B)
    assert tb % 8 == 0 and B % tb == 0, "batch tile must be a multiple of 8 and divide B"
    grid = (B // tb,)

    # Activations tiled over the batch grid; weights/biases pinned in VMEM
    # (constant index_map -> fetched once, resident across all grid steps).
    x_spec = pl.BlockSpec((tb, d_in), lambda i: (i, 0))
    w1_spec = pl.BlockSpec((d_in, H), lambda i: (0, 0))
    b1_spec = pl.BlockSpec((1, H), lambda i: (0, 0))
    w2_spec = pl.BlockSpec((H, 2 * E), lambda i: (0, 0))
    b2_spec = pl.BlockSpec((1, 2 * E), lambda i: (0, 0))
    out_spec = pl.BlockSpec((tb, E), lambda i: (i, 0))

    out_bytes = 4 if out_dtype == jnp.float32 else 2
    cost = pl.CostEstimate(
        flops=2 * B * (d_in * H + H * 2 * E),
        transcendentals=2 * B * E,  # exp + log1p per scale element
        bytes_accessed=(B * d_in * 4                 # f32 input
                        + (d_in * H + H * 2 * E) * 2  # bf16 weights
                        + (H + 2 * E) * 4            # f32 biases
                        + 2 * B * E * out_bytes),    # loc + scale
    )

    loc, scale = pl.pallas_call(
        _ff_likelihood_kernel,
        out_shape=(
            jax.ShapeDtypeStruct((B, E), out_dtype),
            jax.ShapeDtypeStruct((B, E), out_dtype),
        ),
        grid=grid,
        in_specs=[x_spec, w1_spec, b1_spec, w2_spec, b2_spec],
        out_specs=(out_spec, out_spec),
        compiler_params=pltpu.CompilerParams(
            dimension_semantics=("parallel",),      # megacore split on v7x
            vmem_limit_bytes=32 * 1024 * 1024,      # ample for per-step ~2 MiB footprint
        ),
        cost_estimate=cost,
    )(inputs.astype(jnp.float32), w1_mm, b1, w2_mm, b2)
    return loc, scale


def _reference(inputs, w1, b1, w2, b2, event_size):
    # Same numerics as the kernel (bf16 matmul operands, f32 accumulation, fused
    # 2E-wide second GEMM, chunk into loc / softplus(raw_scale)).
    mm = jnp.bfloat16
    h = jnp.dot(inputs.astype(mm), w1.astype(mm),
                preferred_element_type=jnp.float32) + b1
    h = jnp.maximum(h, 0.0)
    out = jnp.dot(h.astype(mm), w2.astype(mm),
                  preferred_element_type=jnp.float32) + b2
    loc = out[:, :event_size]
    scale = jax.nn.softplus(out[:, event_size:])
    return loc, scale


if __name__ == "__main__":
    # Small but hardware-friendly shapes (last dims multiples of 128; batch a
    # multiple of the tile so the grid exercises >1 step).
    B, D_IN, H, E = 512, 128, 256, 128  # batch, latent dim, hidden, event_size

    key = jax.random.PRNGKey(0)
    k_x, k_w1, k_b1, k_w2, k_b2 = jax.random.split(key, 5)

    x = jax.random.normal(k_x, (B, D_IN), dtype=jnp.float32)
    w1 = jax.random.normal(k_w1, (D_IN, H), dtype=jnp.float32) * 0.1
    b1 = jax.random.normal(k_b1, (1, H), dtype=jnp.float32) * 0.1
    w2 = jax.random.normal(k_w2, (H, 2 * E), dtype=jnp.float32) * 0.1
    b2 = jax.random.normal(k_b2, (1, 2 * E), dtype=jnp.float32) * 0.1

    # One-time parameter prep (hoisted out of the per-call path).
    w1_mm, b1_f32, w2_mm, b2_f32 = prepare_params(w1, b1, w2, b2)
    jax.block_until_ready((w1_mm, b1_f32, w2_mm, b2_f32))

    loc, scale = fully_factorized_likelihood(x, w1_mm, b1_f32, w2_mm, b2_f32, E,
                                             block_b=256)
    jax.block_until_ready((loc, scale))

    loc_ref, scale_ref = _reference(x, w1, b1, w2, b2, E)
    assert loc.shape == (B, E) and scale.shape == (B, E)
    assert jnp.allclose(loc, loc_ref, atol=2e-3, rtol=2e-3)
    assert jnp.allclose(scale, scale_ref, atol=2e-3, rtol=2e-3)
    assert bool(jnp.all(scale > 0.0))

    # TODO(synk): torch.distributions.Normal object construction (and .sample with
    # history overwrite) has no Pallas equivalent; kernel emits (loc, scale) params.
    print("KERNEL_OK")
</pallas_src>

<mosaic_0001>
module attributes {stable_mosaic.version = 11 : i64} {
  func.func @_ff_likelihood_kernel(%arg0: i32, %arg1: memref<256x128xf32, #tpu.memory_space<vmem>>, %arg2: memref<128x256xbf16, #tpu.memory_space<vmem>>, %arg3: memref<1x256xf32, #tpu.memory_space<vmem>>, %arg4: memref<256x256xbf16, #tpu.memory_space<vmem>>, %arg5: memref<1x256xf32, #tpu.memory_space<vmem>>, %arg6: memref<256x128xf32, #tpu.memory_space<vmem>>, %arg7: memref<256x128xf32, #tpu.memory_space<vmem>>) attributes {dimension_semantics = [#tpu.dimension_semantics<parallel>], iteration_bounds = array<i64: 2>, scalar_prefetch = 0 : i64, scratch_operands = 0 : i64, tpu.core_type = #tpu.core_type<tc>, window_params = [{transform_indices = @transform_0, window_bounds = array<i64: 256, 128>}, {pipeline_mode = #tpu.pipeline_mode<synchronous>, transform_indices = @transform_1, window_bounds = array<i64: 128, 256>}, {pipeline_mode = #tpu.pipeline_mode<synchronous>, transform_indices = @transform_2, window_bounds = array<i64: 1, 256>}, {pipeline_mode = #tpu.pipeline_mode<synchronous>, transform_indices = @transform_3, window_bounds = array<i64: 256, 256>}, {pipeline_mode = #tpu.pipeline_mode<synchronous>, transform_indices = @transform_4, window_bounds = array<i64: 1, 256>}, {transform_indices = @transform_5, window_bounds = array<i64: 256, 128>}, {transform_indices = @transform_6, window_bounds = array<i64: 256, 128>}]} {
    %c0 = arith.constant 0 : index
    %c0_0 = arith.constant 0 : index
    %0 = vector.load %arg1[%c0, %c0_0] : memref<256x128xf32, #tpu.memory_space<vmem>>, vector<256x128xf32>
    %1 = arith.truncf %0 : vector<256x128xf32> to vector<256x128xbf16>
    %c0_1 = arith.constant 0 : index
    %c0_2 = arith.constant 0 : index
    %2 = vector.load %arg2[%c0_1, %c0_2] : memref<128x256xbf16, #tpu.memory_space<vmem>>, vector<128x256xbf16>
    %cst = arith.constant dense<0.000000e+00> : vector<256x256xf32>
    %3 = tpu.matmul %1, %2, %cst {dimension_numbers = #tpu.dot_dimension_numbers<[1], [0], [0], [1], [0, 0, 1, 1], [], []>} : vector<256x128xbf16>, vector<128x256xbf16>, vector<256x256xf32> -> vector<256x256xf32>
    %c0_3 = arith.constant 0 : index
    %c0_4 = arith.constant 0 : index
    %4 = vector.load %arg3[%c0_3, %c0_4] : memref<1x256xf32, #tpu.memory_space<vmem>>, vector<1x256xf32>
    %5 = vector.broadcast %4 : vector<1x256xf32> to vector<256x256xf32>
    %6 = arith.addf %3, %5 : vector<256x256xf32>
    %cst_5 = arith.constant 0.000000e+00 : f32
    %7 = vector.broadcast %cst_5 : f32 to vector<256x256xf32>
    %8 = arith.maximumf %6, %7 : vector<256x256xf32>
    %9 = arith.truncf %8 : vector<256x256xf32> to vector<256x256xbf16>
    %c0_6 = arith.constant 0 : index
    %c0_7 = arith.constant 0 : index
    %10 = vector.load %arg4[%c0_6, %c0_7] : memref<256x256xbf16, #tpu.memory_space<vmem>>, vector<256x256xbf16>
    %cst_8 = arith.constant dense<0.000000e+00> : vector<256x256xf32>
    %11 = tpu.matmul %9, %10, %cst_8 {dimension_numbers = #tpu.dot_dimension_numbers<[1], [0], [0], [1], [0, 0, 1, 1], [], []>} : vector<256x256xbf16>, vector<256x256xbf16>, vector<256x256xf32> -> vector<256x256xf32>
    %c0_9 = arith.constant 0 : index
    %c0_10 = arith.constant 0 : index
    %12 = vector.load %arg5[%c0_9, %c0_10] : memref<1x256xf32, #tpu.memory_space<vmem>>, vector<1x256xf32>
    %13 = vector.broadcast %12 : vector<1x256xf32> to vector<256x256xf32>
    %14 = arith.addf %11, %13 : vector<256x256xf32>
    %15 = vector.extract_strided_slice %14 {offsets = [0, 0], sizes = [256, 128], strides = [1, 1]} : vector<256x256xf32> to vector<256x128xf32>
    %16 = vector.extract_strided_slice %14 {offsets = [0, 128], sizes = [256, 128], strides = [1, 1]} : vector<256x256xf32> to vector<256x128xf32>
    %c0_11 = arith.constant 0 : index
    %c0_12 = arith.constant 0 : index
    %17 = vector.load %arg6[%c0_11, %c0_12] : memref<256x128xf32, #tpu.memory_space<vmem>>, vector<256x128xf32>
    tpu.vector_store %arg6[%c0_11, %c0_12], %15 {strides = array<i32>} : memref<256x128xf32, #tpu.memory_space<vmem>>, vector<256x128xf32>,
    %cst_13 = arith.constant 0.000000e+00 : f32
    %18 = vector.broadcast %cst_13 : f32 to vector<256x128xf32>
    %19 = arith.maximumf %16, %18 : vector<256x128xf32>
    %20 = math.absf %16 : vector<256x128xf32>
    %cst_14 = arith.constant 0.000000e+00 : f32
    %21 = vector.broadcast %cst_14 : f32 to vector<256x128xf32>
    %22 = arith.subf %21, %20 : vector<256x128xf32>
    %23 = math.exp %22 : vector<256x128xf32>
    %24 = math.log1p %23 : vector<256x128xf32>
    %25 = arith.addf %19, %24 : vector<256x128xf32>
    %c0_15 = arith.constant 0 : index
    %c0_16 = arith.constant 0 : index
    %26 = vector.load %arg7[%c0_15, %c0_16] : memref<256x128xf32, #tpu.memory_space<vmem>>, vector<256x128xf32>
    tpu.vector_store %arg7[%c0_15, %c0_16], %25 {strides = array<i32>} : memref<256x128xf32, #tpu.memory_space<vmem>>, vector<256x128xf32>,
    return
  }
  func.func @transform_0(%arg0: i32) -> (i32, i32) {
    %c0_i32 = arith.constant 0 : i32
    %c0_i32_0 = arith.constant 0 : i32
    return %arg0, %c0_i32 : i32, i32
  }
  func.func @transform_1(%arg0: i32) -> (i32, i32) {
    %c0_i32 = arith.constant 0 : i32
    %c0_i32_0 = arith.constant 0 : i32
    %c0_i32_1 = arith.constant 0 : i32
    return %c0_i32, %c0_i32_0 : i32, i32
  }
  func.func @transform_2(%arg0: i32) -> (i32, i32) {
    %c0_i32 = arith.constant 0 : i32
    %c0_i32_0 = arith.constant 0 : i32
    %c0_i32_1 = arith.constant 0 : i32
    return %c0_i32, %c0_i32_0 : i32, i32
  }
  func.func @transform_3(%arg0: i32) -> (i32, i32) {
    %c0_i32 = arith.constant 0 : i32
    %c0_i32_0 = arith.constant 0 : i32
    %c0_i32_1 = arith.constant 0 : i32
    return %c0_i32, %c0_i32_0 : i32, i32
  }
  func.func @transform_4(%arg0: i32) -> (i32, i32) {
    %c0_i32 = arith.constant 0 : i32
    %c0_i32_0 = arith.constant 0 : i32
    %c0_i32_1 = arith.constant 0 : i32
    return %c0_i32, %c0_i32_0 : i32, i32
  }
  func.func @transform_5(%arg0: i32) -> (i32, i32) {
    %c0_i32 = arith.constant 0 : i32
    %c0_i32_0 = arith.constant 0 : i32
    return %arg0, %c0_i32 : i32, i32
  }
  func.func @transform_6(%arg0: i32) -> (i32, i32) {
    %c0_i32 = arith.constant 0 : i32
    %c0_i32_0 = arith.constant 0 : i32
    return %arg0, %c0_i32 : i32, i32
  }
}

</mosaic_0001>

<llo_original>
// kernel: fully_factorized_likelihood.1
$region0: #{fully_factorized_likelihood.1}
  #allocation0 [shape = 'u32[]', space=smem, size = 0x4, offset = 0x4, fixed_abs, tag = 'smem constant byte address 0x4 - core index']
  #allocation1 [shape = 'u32[144,128]{1,0:T(1,128)}', space=vmem, size = 0x12000, scoped, tag = 'internal scratch']
  %s0 = inlined_call_operand.hbm [shape: f32[512,128], index: 0, kind: input, shape index: {}]
  %s1 = inlined_call_operand.hbm [shape: bf16[128,256], index: 1, kind: input, shape index: {}]
  %s2 = inlined_call_operand.vmem [shape: f32[1,256], index: 2, kind: input, shape index: {}]
  %s3 = inlined_call_operand.hbm [shape: bf16[256,256], index: 3, kind: input, shape index: {}]
  %s4 = inlined_call_operand.vmem [shape: f32[1,256], index: 4, kind: input, shape index: {}]
  %s5 = inlined_call_operand.hbm [shape: f32[512,128], index: 5, kind: output, shape index: {0}]
  %s6 = inlined_call_operand.hbm [shape: f32[512,128], index: 6, kind: output, shape index: {1}]
  %7 = xla_tuple %s5, %s6
  %s8 = sld [smem:[#allocation0]]
  $region73: #{fully_factorized_likelihood.1} parent=0
    _
  %s10 = ssub.s32 1, %s8
  %s11 = scalar_select 0, %s10, %s8
  $region1: #{fully_factorized_likelihood.1} parent=0
    #allocation2 [shape = 'u8[262144]{0}', space=vmem, size = 0x40000, scoped, tag = 'input window, operand 0']
    #allocation3 [shape = 's32[2]{0}', space=sflag, size = 0x8, scoped, tag = 'scoped memory for fully_factorized_likelihood.1']
    #allocation4 [shape = 's32[2]{0}', space=sflag, size = 0x8, scoped, tag = 'scoped memory for fully_factorized_likelihood.1']
    #allocation5 [shape = 'u8[65536]{0}', space=vmem, size = 0x10000, scoped, tag = 'input window, operand 1, single buffered']
    #allocation6 [shape = 's32[1]{0}', space=sflag, size = 0x4, scoped, tag = 'scoped memory for fully_factorized_likelihood.1']
    #allocation7 [shape = 'u8[131072]{0}', space=vmem, size = 0x20000, scoped, tag = 'input window, operand 3, single buffered']
    #allocation8 [shape = 'u8[262144]{0}', space=vmem, size = 0x40000, scoped, tag = 'output window, operand 0']
    #allocation9 [shape = 'u8[262144]{0}', space=vmem, size = 0x40000, scoped, tag = 'output window, operand 1']
    #allocation10 [shape = 's32[2]{0}', space=sflag, size = 0x8, scoped, tag = 'scoped memory for fully_factorized_likelihood.1']
    %12 = vsyncpa [#allocation3], 0
    %s13 = scalar_lea.sflag [#allocation3], 1
    %14 = vsyncpa %s13, 0
    %15 = vsyncpa [#allocation6], 0
    %16 = vsyncpa [#allocation4], 0
    %s17 = scalar_lea.sflag [#allocation4], 1
    %18 = vsyncpa %s17, 0
    %19 = vsyncpa [#allocation10], 0
    %s20 = scalar_lea.sflag [#allocation10], 1
    %21 = vsyncpa %s20, 0
    loop: start=0, step=1, limit=4
    $region2: #{fully_factorized_likelihood.1} parent=1 // loop_pre_header
      _
    $region3: #{fully_factorized_likelihood.1} parent=1 // loop_header
      %s23 = sphi 0, %s27
      %p24 = scmp.ge.s32.totalorder %s23, 4
      %s33 = sphi 0, %s35
      %s36 = sphi 0, %s33
      %s37 = sphi 0, %s36
      %s53 = sphi 0, %s37
      %s57 = sphi 0, %s57
      %s59 = sphi 0, %s57
      %s60 = sphi 0, %s59
      %s74 = sphi 0, %s60
      %s78 = sphi 0, %s78
      %s80 = sphi 0, %s78
      %s81 = sphi 0, %s80
      %s95 = sphi 0, %s81
      %s99 = sphi 0, %s99
      %s101 = sphi 0, %s99
      %s102 = sphi 0, %s101
      %s116 = sphi 0, %s102
      %s120 = sphi 0, %s120
      %s122 = sphi 0, %s120
      %s123 = sphi 0, %s122
      %s137 = sphi 0, %s123
      %s143 = sphi 0, %s145
      %s146 = sphi 0, %s143
      %s147 = sphi 0, %s146
      %s163 = sphi 0, %s147
      %s169 = sphi 0, %s171
      %s172 = sphi 0, %s169
      %s173 = sphi 0, %s172
      %s189 = sphi 0, %s173
    $region4: #{fully_factorized_likelihood.1} parent=1 // loop_header_branch
      %26 = sbr.rel (%p24) target = $region8
    $region5: #{fully_factorized_likelihood.1} parent=1 // loop_body
      %s28 = ssub.s32 %s23, 1
      %s29 = ssub.s32 %s23, 2
      %s30 = sadd.s32 %s23, 1
      %s31 = ssub.s32 %s23, %s30
      %p32 = scmp.eq.s32.totalorder %s31, 0
      %s34 = sadd.s32 %s33, 1
      %s35 = scalar_select %p32, %s33, %s34
      %p38 = pneg %p32
      %p39 = scmp.eq.s32.totalorder %s23, 1
      %p40 = por %p38, %p39
      %p41 = scmp.ne.s32.totalorder %s33, %s36
      %p42 = scmp.eq.s32.totalorder %s23, 0
      %p43 = por %p41, %p42
      %p44 = scmp.ne.s32.totalorder %s33, %s36
      %p45 = scmp.eq.s32.totalorder %s28, 1
      %p46 = por %p44, %p45
      %p47 = scmp.ne.s32.totalorder %s36, %s37
      %p48 = scmp.eq.s32.totalorder %s28, 0
      %p49 = por %p47, %p48
      %p50 = scmp.ne.s32.totalorder %s36, %s37
      %p51 = scmp.eq.s32.totalorder %s29, 1
      %p52 = por %p50, %p51
      %p54 = scmp.ne.s32.totalorder %s37, %s53
      %p55 = scmp.eq.s32.totalorder %s29, 0
      %p56 = por %p54, %p55
      %s58 = sadd.s32 %s57, 1
      %p61 = scmp.eq.s32.totalorder %s23, 1
      %p62 = scmp.ne.s32.totalorder %s57, %s59
      %p63 = scmp.eq.s32.totalorder %s23, 0
      %p64 = por %p62, %p63
      %p65 = scmp.ne.s32.totalorder %s57, %s59
      %p66 = scmp.eq.s32.totalorder %s28, 1
      %p67 = por %p65, %p66
      %p68 = scmp.ne.s32.totalorder %s59, %s60
      %p69 = scmp.eq.s32.totalorder %s28, 0
      %p70 = por %p68, %p69
      %p71 = scmp.ne.s32.totalorder %s59, %s60
      %p72 = scmp.eq.s32.totalorder %s29, 1
      %p73 = por %p71, %p72
      %p75 = scmp.ne.s32.totalorder %s60, %s74
      %p76 = scmp.eq.s32.totalorder %s29, 0
      %p77 = por %p75, %p76
      %s79 = sadd.s32 %s78, 1
      %p82 = scmp.eq.s32.totalorder %s23, 1
      %p83 = scmp.ne.s32.totalorder %s78, %s80
      %p84 = scmp.eq.s32.totalorder %s23, 0
      %p85 = por %p83, %p84
      %p86 = scmp.ne.s32.totalorder %s78, %s80
      %p87 = scmp.eq.s32.totalorder %s28, 1
      %p88 = por %p86, %p87
      %p89 = scmp.ne.s32.totalorder %s80, %s81
      %p90 = scmp.eq.s32.totalorder %s28, 0
      %p91 = por %p89, %p90
      %p92 = scmp.ne.s32.totalorder %s80, %s81
      %p93 = scmp.eq.s32.totalorder %s29, 1
      %p94 = por %p92, %p93
      %p96 = scmp.ne.s32.totalorder %s81, %s95
      %p97 = scmp.eq.s32.totalorder %s29, 0
      %p98 = por %p96, %p97
      %s100 = sadd.s32 %s99, 1
      %p103 = scmp.eq.s32.totalorder %s23, 1
      %p104 = scmp.ne.s32.totalorder %s99, %s101
      %p105 = scmp.eq.s32.totalorder %s23, 0
      %p106 = por %p104, %p105
      %p107 = scmp.ne.s32.totalorder %s99, %s101
      %p108 = scmp.eq.s32.totalorder %s28, 1
      %p109 = por %p107, %p108
      %p110 = scmp.ne.s32.totalorder %s101, %s102
      %p111 = scmp.eq.s32.totalorder %s28, 0
      %p112 = por %p110, %p111
      %p113 = scmp.ne.s32.totalorder %s101, %s102
      %p114 = scmp.eq.s32.totalorder %s29, 1
      %p115 = por %p113, %p114
      %p117 = scmp.ne.s32.totalorder %s102, %s116
      %p118 = scmp.eq.s32.totalorder %s29, 0
      %p119 = por %p117, %p118
      %s121 = sadd.s32 %s120, 1
      %p124 = scmp.eq.s32.totalorder %s23, 1
      %p125 = scmp.ne.s32.totalorder %s120, %s122
      %p126 = scmp.eq.s32.totalorder %s23, 0
      %p127 = por %p125, %p126
      %p128 = scmp.ne.s32.totalorder %s120, %s122
      %p129 = scmp.eq.s32.totalorder %s28, 1
      %p130 = por %p128, %p129
      %p131 = scmp.ne.s32.totalorder %s122, %s123
      %p132 = scmp.eq.s32.totalorder %s28, 0
      %p133 = por %p131, %p132
      %p134 = scmp.ne.s32.totalorder %s122, %s123
      %p135 = scmp.eq.s32.totalorder %s29, 1
      %p136 = por %p134, %p135
      %p138 = scmp.ne.s32.totalorder %s123, %s137
      %p139 = scmp.eq.s32.totalorder %s29, 0
      %p140 = por %p138, %p139
      %s141 = ssub.s32 %s23, %s30
      %p142 = scmp.eq.s32.totalorder %s141, 0
      %s144 = sadd.s32 %s143, 1
      %s145 = scalar_select %p142, %s143, %s144
      %p148 = pneg %p142
      %p149 = scmp.eq.s32.totalorder %s23, 1
      %p150 = por %p148, %p149
      %p151 = scmp.ne.s32.totalorder %s143, %s146
      %p152 = scmp.eq.s32.totalorder %s23, 0
      %p153 = por %p151, %p152
      %p154 = scmp.ne.s32.totalorder %s143, %s146
      %p155 = scmp.eq.s32.totalorder %s28, 1
      %p156 = por %p154, %p155
      %p157 = scmp.ne.s32.totalorder %s146, %s147
      %p158 = scmp.eq.s32.totalorder %s28, 0
      %p159 = por %p157, %p158
      %p160 = scmp.ne.s32.totalorder %s146, %s147
      %p161 = scmp.eq.s32.totalorder %s29, 1
      %p162 = por %p160, %p161
      %p164 = scmp.ne.s32.totalorder %s147, %s163
      %p165 = scmp.eq.s32.totalorder %s29, 0
      %p166 = por %p164, %p165
      %s167 = ssub.s32 %s23, %s30
      %p168 = scmp.eq.s32.totalorder %s167, 0
      %s170 = sadd.s32 %s169, 1
      %s171 = scalar_select %p168, %s169, %s170
      %p174 = pneg %p168
      %p175 = scmp.eq.s32.totalorder %s23, 1
      %p176 = por %p174, %p175
      %p177 = scmp.ne.s32.totalorder %s169, %s172
      %p178 = scmp.eq.s32.totalorder %s23, 0
      %p179 = por %p177, %p178
      %p180 = scmp.ne.s32.totalorder %s169, %s172
      %p181 = scmp.eq.s32.totalorder %s28, 1
      %p182 = por %p180, %p181
      %p183 = scmp.ne.s32.totalorder %s172, %s173
      %p184 = scmp.eq.s32.totalorder %s28, 0
      %p185 = por %p183, %p184
      %p186 = scmp.ne.s32.totalorder %s172, %s173
      %p187 = scmp.eq.s32.totalorder %s29, 1
      %p188 = por %p186, %p187
      %p190 = scmp.ne.s32.totalorder %s173, %s189
      %p191 = scmp.eq.s32.totalorder %s29, 0
      %p192 = por %p190, %p191
      %p193 = scmp.le.s32.totalorder 1, %s23
      %p194 = scmp.lt.s32.totalorder %s23, 3
      %p195 = pnand %p193, %p194
      %p196 = pneg %p195
      // Predicated region
      $region9: #{fully_factorized_likelihood.1} parent=5 // pred_check
        _
      $region10: #{fully_factorized_likelihood.1} parent=5 // pred_check_branch
        %198 = sbr.rel (%p195) target = $region12
      $region11: #{fully_factorized_likelihood.1} parent=5 // pred_region
        %s199 = ssub.s32 %s23, 1
        // Predicated region
        $region13: #{fully_factorized_likelihood.1} parent=11 // pred_check
          %p200 = pneg %p70
        $region14: #{fully_factorized_likelihood.1} parent=11 // pred_check_branch
          %202 = sbr.rel (%p200) target = $region16
        $region15: #{fully_factorized_likelihood.1} parent=11 // pred_region
          %s204 = ssub.s32 2048, 2048
          %205 = vsyncadd [#allocation6], %s204
          %s206 = sshll.u32 [#allocation5], 4
          %s207 = int_to_ptr.vmem [resolvable:$true] %s206
          %212 = dma.hbm_to_vmem [thread:$0]  %s1, 2048, %s207, [#allocation6], 128, 128, 8
        $region16: #{fully_factorized_likelihood.1} parent=11 // pred_fallthru
          _
        // Predicated region
        $region17: #{fully_factorized_likelihood.1} parent=11 // pred_check
          %p213 = pneg %p91
        $region18: #{fully_factorized_likelihood.1} parent=11 // pred_check_branch
          %215 = sbr.rel (%p213) target = $region20
        $region19: #{fully_factorized_likelihood.1} parent=11 // pred_region
          _
        $region20: #{fully_factorized_likelihood.1} parent=11 // pred_fallthru
          _
        // Predicated region
        $region21: #{fully_factorized_likelihood.1} parent=11 // pred_check
          %p216 = pneg %p112
        $region22: #{fully_factorized_likelihood.1} parent=11 // pred_check_branch
          %218 = sbr.rel (%p216) target = $region24
        $region23: #{fully_factorized_likelihood.1} parent=11 // pred_region
          %s220 = ssub.s32 4096, 4096
          %221 = vsyncadd [#allocation6], %s220
          %s222 = sshll.u32 [#allocation7], 4
          %s223 = int_to_ptr.vmem [resolvable:$true] %s222
          %228 = dma.hbm_to_vmem [thread:$0]  %s3, 4096, %s223, [#allocation6], 128, 128, 8
        $region24: #{fully_factorized_likelihood.1} parent=11 // pred_fallthru
          _
        // Predicated region
        $region25: #{fully_factorized_likelihood.1} parent=11 // pred_check
          %p229 = pneg %p133
        $region26: #{fully_factorized_likelihood.1} parent=11 // pred_check_branch
          %231 = sbr.rel (%p229) target = $region28
        $region27: #{fully_factorized_likelihood.1} parent=11 // pred_region
          _
        $region28: #{fully_factorized_likelihood.1} parent=11 // pred_fallthru
          _
      $region12: #{fully_factorized_likelihood.1} parent=5 // pred_fallthru
        _
      %p232 = scmp.lt.s32.totalorder %s23, 2
      // Predicated region
      $region29: #{fully_factorized_likelihood.1} parent=5 // pred_check
        %p233 = pneg %p232
      $region30: #{fully_factorized_likelihood.1} parent=5 // pred_check_branch
        %235 = sbr.rel (%p233) target = $region32
      $region31: #{fully_factorized_likelihood.1} parent=5 // pred_region
        // Predicated region
        $region33: #{fully_factorized_likelihood.1} parent=31 // pred_check
          %p236 = pneg %p43
        $region34: #{fully_factorized_likelihood.1} parent=31 // pred_check_branch
          %238 = sbr.rel (%p236) target = $region36
        $region35: #{fully_factorized_likelihood.1} parent=31 // pred_region
          %s239 = sand.u32 %s33, 1
          %s240 = scalar_lea.sflag [#allocation3], %s239
          %s241 = sand.u32 %s33, 1
          %s242 = smul.addr %s241, 256
          %s243 = scalar_lea.vmem [#allocation2], %s242
          %s244 = smul.u32 32, %s23
          %s246 = ssub.s32 4096, 4096
          %247 = vsyncadd %s240, %s246
          %s248 = smul.addr %s244, 128
          %s249 = scalar_lea.hbm %s0, %s248
          %s250 = sshll.u32 %s243, 4
          %s251 = int_to_ptr.vmem [resolvable:$true] %s250
          %256 = dma.hbm_to_vmem [thread:$0]  %s249, 4096, %s251, %s240, 128, 128, 8
        $region36: #{fully_factorized_likelihood.1} parent=31 // pred_fallthru
          _
      $region32: #{fully_factorized_likelihood.1} parent=5 // pred_fallthru
        _
      %p257 = scmp.le.s32.totalorder 1, %s23
      %p258 = scmp.lt.s32.totalorder %s23, 3
      %p259 = pnand %p257, %p258
      %p260 = pneg %p259
      // Predicated region
      $region37: #{fully_factorized_likelihood.1} parent=5 // pred_check
        _
      $region38: #{fully_factorized_likelihood.1} parent=5 // pred_check_branch
        %262 = sbr.rel (%p259) target = $region40
      $region39: #{fully_factorized_likelihood.1} parent=5 // pred_region
        %s263 = ssub.s32 %s23, 1
        %s264 = sand.u32 %s36, 1
        %s265 = scalar_lea.sflag [#allocation3], %s264
        %s266 = sand.u32 %s36, 1
        %s267 = smul.addr %s266, 256
        %s268 = scalar_lea.vmem [#allocation2], %s267
        // Predicated region
        $region41: #{fully_factorized_likelihood.1} parent=39 // pred_check
          %p269 = pneg %p49
        $region42: #{fully_factorized_likelihood.1} parent=39 // pred_check_branch
          %271 = sbr.rel (%p269) target = $region44
        $region43: #{fully_factorized_likelihood.1} parent=39 // pred_region
          %272 = dma.done %s265, 4096
        $region44: #{fully_factorized_likelihood.1} parent=39 // pred_fallthru
          _
        // Predicated region
        $region45: #{fully_factorized_likelihood.1} parent=39 // pred_check
          %p273 = pneg %p70
        $region46: #{fully_factorized_likelihood.1} parent=39 // pred_check_branch
          %275 = sbr.rel (%p273) target = $region48
        $region47: #{fully_factorized_likelihood.1} parent=39 // pred_region
          %276 = dma.done [#allocation6], 2048
        $region48: #{fully_factorized_likelihood.1} parent=39 // pred_fallthru
          _
        // Predicated region
        $region49: #{fully_factorized_likelihood.1} parent=39 // pred_check
          %p277 = pneg %p112
        $region50: #{fully_factorized_likelihood.1} parent=39 // pred_check_branch
          %279 = sbr.rel (%p277) target = $region52
        $region51: #{fully_factorized_likelihood.1} parent=39 // pred_region
          %280 = dma.done [#allocation6], 4096
        $region52: #{fully_factorized_likelihood.1} parent=39 // pred_fallthru
          _
        %s281 = sand.u32 %s36, 1
        %s282 = scalar_lea.sflag [#allocation3], %s281
        %s283 = sand.u32 %s36, 1
        %s284 = smul.addr %s283, 256
        %s285 = scalar_lea.vmem [#allocation2], %s284
        %p286 = pneg %p49
        %p287 = pneg %p46
        %p288 = pneg %p70
        %p289 = pneg %p67
        %p290 = pneg %p91
        %p291 = pneg %p88
        %p292 = pneg %p112
        %p293 = pneg %p109
        %p294 = pneg %p133
        %p295 = pneg %p130
        %p296 = pneg %p159
        %p297 = pneg %p156
        %s298 = sand.u32 %s146, 1
        %s299 = scalar_lea.sflag [#allocation4], %s298
        %s300 = sand.u32 %s146, 1
        %s301 = smul.addr %s300, 256
        %s302 = scalar_lea.vmem [#allocation8], %s301
        %p303 = pneg %p185
        %p304 = pneg %p182
        %s305 = sand.u32 %s172, 1
        %s306 = scalar_lea.sflag [#allocation10], %s305
        %s307 = sand.u32 %s172, 1
        %s308 = smul.addr %s307, 256
        %s309 = scalar_lea.vmem [#allocation9], %s308
        %s310 = smul.u32 32, %s28
        %s311 = smul.u32 32, %s28
        %s312 = smul.u32 32, %s28
        %v314 = vld [vmem:[%s268] sm:$0xff]
        %v315 = vld [vmem:[%s268 + $0x8] sm:$0xff]
        %v316 = vld [vmem:[%s268 + $0x10] sm:$0xff]
        %v317 = vld [vmem:[%s268 + $0x18] sm:$0xff]
        %v318 = vld [vmem:[%s268 + $0x20] sm:$0xff]
        %v319 = vld [vmem:[%s268 + $0x28] sm:$0xff]
        %v320 = vld [vmem:[%s268 + $0x30] sm:$0xff]
        %v321 = vld [vmem:[%s268 + $0x38] sm:$0xff]
        %v322 = vld [vmem:[%s268 + $0x40] sm:$0xff]
        %v323 = vld [vmem:[%s268 + $0x48] sm:$0xff]
        %v324 = vld [vmem:[%s268 + $0x50] sm:$0xff]
        %v325 = vld [vmem:[%s268 + $0x58] sm:$0xff]
        %v326 = vld [vmem:[%s268 + $0x60] sm:$0xff]
        %v327 = vld [vmem:[%s268 + $0x68] sm:$0xff]
        %v328 = vld [vmem:[%s268 + $0x70] sm:$0xff]
        %v329 = vld [vmem:[%s268 + $0x78] sm:$0xff]
        %v330 = vld [vmem:[%s268 + $0x80] sm:$0xff]
        %v331 = vld [vmem:[%s268 + $0x88] sm:$0xff]
        %v332 = vld [vmem:[%s268 + $0x90] sm:$0xff]
        %v333 = vld [vmem:[%s268 + $0x98] sm:$0xff]
        %v334 = vld [vmem:[%s268 + $0xa0] sm:$0xff]
        %v335 = vld [vmem:[%s268 + $0xa8] sm:$0xff]
        %v336 = vld [vmem:[%s268 + $0xb0] sm:$0xff]
        %v337 = vld [vmem:[%s268 + $0xb8] sm:$0xff]
        %v338 = vld [vmem:[%s268 + $0xc0] sm:$0xff]
        %v339 = vld [vmem:[%s268 + $0xc8] sm:$0xff]
        %v340 = vld [vmem:[%s268 + $0xd0] sm:$0xff]
        %v341 = vld [vmem:[%s268 + $0xd8] sm:$0xff]
        %v342 = vld [vmem:[%s268 + $0xe0] sm:$0xff]
        %v343 = vld [vmem:[%s268 + $0xe8] sm:$0xff]
        %v344 = vld [vmem:[%s268 + $0xf0] sm:$0xff]
        %v345 = vld [vmem:[%s268 + $0xf8] sm:$0xff]
        %v346 = vpack.c.bf16 %v315, %v314
        %v347 = vpack.c.bf16 %v317, %v316
        %v348 = vpack.c.bf16 %v319, %v318
        %v349 = vpack.c.bf16 %v321, %v320
        %v350 = vpack.c.bf16 %v323, %v322
        %v351 = vpack.c.bf16 %v325, %v324
        %v352 = vpack.c.bf16 %v327, %v326
        %v353 = vpack.c.bf16 %v329, %v328
        %v354 = vpack.c.bf16 %v331, %v330
        %v355 = vpack.c.bf16 %v333, %v332
        %v356 = vpack.c.bf16 %v335, %v334
        %v357 = vpack.c.bf16 %v337, %v336
        %v358 = vpack.c.bf16 %v339, %v338
        %v359 = vpack.c.bf16 %v341, %v340
        %v360 = vpack.c.bf16 %v343, %v342
        %v361 = vpack.c.bf16 %v345, %v344
        %v362 = vld [vmem:[#allocation5] sm:$0xff]
        %v363 = vld [vmem:[#allocation5 + $0x8] sm:$0xff]
        %v364 = vld [vmem:[#allocation5 + $0x10] sm:$0xff]
        %v365 = vld [vmem:[#allocation5 + $0x18] sm:$0xff]
        %v366 = vld [vmem:[#allocation5 + $0x20] sm:$0xff]
        %v367 = vld [vmem:[#allocation5 + $0x28] sm:$0xff]
        %v368 = vld [vmem:[#allocation5 + $0x30] sm:$0xff]
        %v369 = vld [vmem:[#allocation5 + $0x38] sm:$0xff]
        %v370 = vld [vmem:[#allocation5 + $0x40] sm:$0xff]
        %v371 = vld [vmem:[#allocation5 + $0x48] sm:$0xff]
        %v372 = vld [vmem:[#allocation5 + $0x50] sm:$0xff]
        %v373 = vld [vmem:[#allocation5 + $0x58] sm:$0xff]
        %v374 = vld [vmem:[#allocation5 + $0x60] sm:$0xff]
        %v375 = vld [vmem:[#allocation5 + $0x68] sm:$0xff]
        %v376 = vld [vmem:[#allocation5 + $0x70] sm:$0xff]
        %v377 = vld [vmem:[#allocation5 + $0x78] sm:$0xff]
        %v378 = vld [vmem:[%s2] sm:$0x3]
        %v380 = vlaneseq
        %v381 = vshrl.u32 %v380, 7
        %v382 = vsub.s32 0, %v381
        %v383 = vrot.slane %v378, %v382
        %v384 = vlaneseq
        %v385 = vshrl.u32 %v384, 7
        %v386 = vsub.s32 1, %v385
        %v387 = vrot.slane %v378, %v386
        %v406 = vunpack.c.l.b16 %v362
        %v407 = vunpack.c.h.b16 %v362
        %v408 = vunpack.c.l.b16 %v363
        %v409 = vunpack.c.h.b16 %v363
        %v410 = vunpack.c.l.b16 %v364
        %v411 = vunpack.c.h.b16 %v364
        %v412 = vunpack.c.l.b16 %v365
        %v413 = vunpack.c.h.b16 %v365
        %v414 = vunpack.c.l.b16 %v366
        %v415 = vunpack.c.h.b16 %v366
        %v416 = vunpack.c.l.b16 %v367
        %v417 = vunpack.c.h.b16 %v367
        %v418 = vunpack.c.l.b16 %v368
        %v419 = vunpack.c.h.b16 %v368
        %v420 = vunpack.c.l.b16 %v369
        %v421 = vunpack.c.h.b16 %v369
        %v422 = vunpack.c.l.b16 %v370
        %v423 = vunpack.c.h.b16 %v370
        %v424 = vunpack.c.l.b16 %v371
        %v425 = vunpack.c.h.b16 %v371
        %v426 = vunpack.c.l.b16 %v372
        %v427 = vunpack.c.h.b16 %v372
        %v428 = vunpack.c.l.b16 %v373
        %v429 = vunpack.c.h.b16 %v373
        %v430 = vunpack.c.l.b16 %v374
        %v431 = vunpack.c.h.b16 %v374
        %v432 = vunpack.c.l.b16 %v375
        %v433 = vunpack.c.h.b16 %v375
        %v434 = vunpack.c.l.b16 %v376
        %v435 = vunpack.c.h.b16 %v376
        %v436 = vunpack.c.l.b16 %v377
        %v437 = vunpack.c.h.b16 %v377
        %v438 = vpack.c.b16 %v408, %v406
        %v439 = vpack.c.b16 %v409, %v407
        %v440 = vpack.c.b16 %v412, %v410
        %v441 = vpack.c.b16 %v413, %v411
        %v442 = vpack.c.b16 %v416, %v414
        %v443 = vpack.c.b16 %v417, %v415
        %v444 = vpack.c.b16 %v420, %v418
        %v445 = vpack.c.b16 %v421, %v419
        %v446 = vpack.c.b16 %v424, %v422
        %v447 = vpack.c.b16 %v425, %v423
        %v448 = vpack.c.b16 %v428, %v426
        %v449 = vpack.c.b16 %v429, %v427
        %v450 = vpack.c.b16 %v432, %v430
        %v451 = vpack.c.b16 %v433, %v431
        %v452 = vpack.c.b16 %v436, %v434
        %v453 = vpack.c.b16 %v437, %v435
        %470 = vmatprep.subr.bf16.mxu0 %v439
        %471 = vmatpush1.bf16.msra.mxu0 %v438
        %472 = vmatprep.subr.bf16.mxu0 %v441
        %473 = vmatpush1.bf16.msra.mxu0 %v440
        %474 = vmatprep.subr.bf16.mxu0 %v443
        %475 = vmatpush1.bf16.msra.mxu0 %v442
        %476 = vmatprep.subr.bf16.mxu0 %v445
        %477 = vmatpush1.bf16.msra.mxu0 %v444
        %478 = vmatprep.subr.bf16.mxu0 %v447
        %479 = vmatpush1.bf16.msra.mxu0 %v446
        %480 = vmatprep.subr.bf16.mxu0 %v449
        %481 = vmatpush1.bf16.msra.mxu0 %v448
        %482 = vmatprep.subr.bf16.mxu0 %v451
        %483 = vmatpush1.bf16.msra.mxu0 %v450
        %484 = vmatprep.subr.bf16.mxu0 %v453
        %485 = vmatpush1.bf16.msra.mxu0 %v452
        %486 = vmatprep.subr.bf16.mxu0 0
        %487 = vmatpush1.bf16.msra.mxu0 0
        %488 = vmatprep.subr.bf16.mxu0 0
        %489 = vmatpush1.bf16.msra.mxu0 0
        %490 = vmatprep.subr.bf16.mxu0 0
        %491 = vmatpush1.bf16.msra.mxu0 0
        %492 = vmatprep.subr.bf16.mxu0 0
        %493 = vmatpush1.bf16.msra.mxu0 0
        %494 = vmatprep.subr.bf16.mxu0 0
        %495 = vmatpush1.bf16.msra.mxu0 0
        %496 = vmatprep.subr.bf16.mxu0 0
        %497 = vmatpush1.bf16.msra.mxu0 0
        %498 = vmatprep.subr.bf16.mxu0 0
        %499 = vmatpush1.bf16.msra.mxu0 0
        %500 = vmatprep.subr.bf16.mxu0 0
        %501 = vmatpush1.bf16.msra.mxu0 0
        %502 = vmatprep.mubr.bf16.mxu0 0
        %503 = vmatmul.mubr.bf16.gmra.mrb[0].mxu0 %v346
        %v504 = vpop.f32.mrb[0].mxu0
        %v505 = vadd.f32 %v383, %v504
        %v506 = vpop.f32.mrb[0].mxu0
        %v507 = vadd.f32 %v387, %v506
        %v508 = vpop.f32.mrb[0].mxu0
        %v509 = vadd.f32 %v383, %v508
        %v510 = vpop.f32.mrb[0].mxu0
        %v511 = vadd.f32 %v387, %v510
        %512 = vmatprep.mubr.bf16.mxu0 0
        %513 = vmatmul.mubr.bf16.gmra.mrb[0].mxu0 %v347
        %v514 = vpop.f32.mrb[0].mxu0
        %v515 = vadd.f32 %v383, %v514
        %v516 = vpop.f32.mrb[0].mxu0
        %v517 = vadd.f32 %v387, %v516
        %v518 = vpop.f32.mrb[0].mxu0
        %v519 = vadd.f32 %v383, %v518
        %v520 = vpop.f32.mrb[0].mxu0
        %v521 = vadd.f32 %v387, %v520
        %522 = vmatprep.mubr.bf16.mxu0 0
        %523 = vmatmul.mubr.bf16.gmra.mrb[0].mxu0 %v348
        %v524 = vpop.f32.mrb[0].mxu0
        %v525 = vadd.f32 %v383, %v524
        %v526 = vpop.f32.mrb[0].mxu0
        %v527 = vadd.f32 %v387, %v526
        %v528 = vpop.f32.mrb[0].mxu0
        %v529 = vadd.f32 %v383, %v528
        %v530 = vpop.f32.mrb[0].mxu0
        %v531 = vadd.f32 %v387, %v530
        %532 = vmatprep.mubr.bf16.mxu0 0
        %533 = vmatmul.mubr.bf16.gmra.mrb[0].mxu0 %v349
        %v534 = vpop.f32.mrb[0].mxu0
        %v535 = vadd.f32 %v383, %v534
        %v536 = vpop.f32.mrb[0].mxu0
        %v537 = vadd.f32 %v387, %v536
        %v538 = vpop.f32.mrb[0].mxu0
        %v539 = vadd.f32 %v383, %v538
        %v540 = vpop.f32.mrb[0].mxu0
        %v541 = vadd.f32 %v387, %v540
        %542 = vmatprep.mubr.bf16.mxu0 0
        %543 = vmatmul.mubr.bf16.gmra.mrb[0].mxu0 %v350
        %v544 = vpop.f32.mrb[0].mxu0
        %v545 = vadd.f32 %v383, %v544
        %v546 = vpop.f32.mrb[0].mxu0
        %v547 = vadd.f32 %v387, %v546
        %v548 = vpop.f32.mrb[0].mxu0
        %v549 = vadd.f32 %v383, %v548
        %v550 = vpop.f32.mrb[0].mxu0
        %v551 = vadd.f32 %v387, %v550
        %552 = vmatprep.mubr.bf16.mxu0 0
        %553 = vmatmul.mubr.bf16.gmra.mrb[0].mxu0 %v351
        %v554 = vpop.f32.mrb[0].mxu0
        %v555 = vadd.f32 %v383, %v554
        %v556 = vpop.f32.mrb[0].mxu0
        %v557 = vadd.f32 %v387, %v556
        %v558 = vpop.f32.mrb[0].mxu0
        %v559 = vadd.f32 %v383, %v558
        %v560 = vpop.f32.mrb[0].mxu0
        %v561 = vadd.f32 %v387, %v560
        %562 = vmatprep.mubr.bf16.mxu0 0
        %563 = vmatmul.mubr.bf16.gmra.mrb[0].mxu0 %v352
        %v564 = vpop.f32.mrb[0].mxu0
        %v565 = vadd.f32 %v383, %v564
        %v566 = vpop.f32.mrb[0].mxu0
        %v567 = vadd.f32 %v387, %v566
        %v568 = vpop.f32.mrb[0].mxu0
        %v569 = vadd.f32 %v383, %v568
        %v570 = vpop.f32.mrb[0].mxu0
        %v571 = vadd.f32 %v387, %v570
        %572 = vmatprep.mubr.bf16.mxu0 0
        %573 = vmatmul.mubr.bf16.gmra.mrb[0].mxu0 %v353
        %v574 = vpop.f32.mrb[0].mxu0
        %v575 = vadd.f32 %v383, %v574
        %v576 = vpop.f32.mrb[0].mxu0
        %v577 = vadd.f32 %v387, %v576
        %v578 = vpop.f32.mrb[0].mxu0
        %v579 = vadd.f32 %v383, %v578
        %v580 = vpop.f32.mrb[0].mxu0
        %v581 = vadd.f32 %v387, %v580
        %582 = vmatprep.mubr.bf16.mxu0 0
        %583 = vmatmul.mubr.bf16.gmra.mrb[0].mxu0 %v354
        %v584 = vpop.f32.mrb[0].mxu0
        %v585 = vadd.f32 %v383, %v584
        %v586 = vpop.f32.mrb[0].mxu0
        %v587 = vadd.f32 %v387, %v586
        %v588 = vpop.f32.mrb[0].mxu0
        %v589 = vadd.f32 %v383, %v588
        %v590 = vpop.f32.mrb[0].mxu0
        %v591 = vadd.f32 %v387, %v590
        %592 = vmatprep.mubr.bf16.mxu0 0
        %593 = vmatmul.mubr.bf16.gmra.mrb[0].mxu0 %v355
        %v594 = vpop.f32.mrb[0].mxu0
        %v595 = vadd.f32 %v383, %v594
        %v596 = vpop.f32.mrb[0].mxu0
        %v597 = vadd.f32 %v387, %v596
        %v598 = vpop.f32.mrb[0].mxu0
        %v599 = vadd.f32 %v383, %v598
        %v600 = vpop.f32.mrb[0].mxu0
        %v601 = vadd.f32 %v387, %v600
        %602 = vmatprep.mubr.bf16.mxu0 0
        %603 = vmatmul.mubr.bf16.gmra.mrb[0].mxu0 %v356
        %v604 = vpop.f32.mrb[0].mxu0
        %v605 = vadd.f32 %v383, %v604
        %v606 = vpop.f32.mrb[0].mxu0
        %v607 = vadd.f32 %v387, %v606
        %v608 = vpop.f32.mrb[0].mxu0
        %v609 = vadd.f32 %v383, %v608
        %v610 = vpop.f32.mrb[0].mxu0
        %v611 = vadd.f32 %v387, %v610
        %612 = vmatprep.mubr.bf16.mxu0 0
        %613 = vmatmul.mubr.bf16.gmra.mrb[0].mxu0 %v357
        %v614 = vpop.f32.mrb[0].mxu0
        %v615 = vadd.f32 %v383, %v614
        %v616 = vpop.f32.mrb[0].mxu0
        %v617 = vadd.f32 %v387, %v616
        %v618 = vpop.f32.mrb[0].mxu0
        %v619 = vadd.f32 %v383, %v618
        %v620 = vpop.f32.mrb[0].mxu0
        %v621 = vadd.f32 %v387, %v620
        %622 = vmatprep.mubr.bf16.mxu0 0
        %623 = vmatmul.mubr.bf16.gmra.mrb[0].mxu0 %v358
        %v624 = vpop.f32.mrb[0].mxu0
        %v625 = vadd.f32 %v383, %v624
        %v626 = vpop.f32.mrb[0].mxu0
        %v627 = vadd.f32 %v387, %v626
        %v628 = vpop.f32.mrb[0].mxu0
        %v629 = vadd.f32 %v383, %v628
        %v630 = vpop.f32.mrb[0].mxu0
        %v631 = vadd.f32 %v387, %v630
        %632 = vmatprep.mubr.bf16.mxu0 0
        %633 = vmatmul.mubr.bf16.gmra.mrb[0].mxu0 %v359
        %v634 = vpop.f32.mrb[0].mxu0
        %v635 = vadd.f32 %v383, %v634
        %v636 = vpop.f32.mrb[0].mxu0
        %v637 = vadd.f32 %v387, %v636
        %v638 = vpop.f32.mrb[0].mxu0
        %v639 = vadd.f32 %v383, %v638
        %v640 = vpop.f32.mrb[0].mxu0
        %v641 = vadd.f32 %v387, %v640
        %642 = vmatprep.mubr.bf16.mxu0 0
        %643 = vmatmul.mubr.bf16.gmra.mrb[0].mxu0 %v360
        %v644 = vpop.f32.mrb[0].mxu0
        %v645 = vadd.f32 %v383, %v644
        %v646 = vpop.f32.mrb[0].mxu0
        %v647 = vadd.f32 %v387, %v646
        %v648 = vpop.f32.mrb[0].mxu0
        %v649 = vadd.f32 %v383, %v648
        %v650 = vpop.f32.mrb[0].mxu0
        %v651 = vadd.f32 %v387, %v650
        %652 = vmatprep.mubr.bf16.mxu0 0
        %653 = vmatmul.mubr.bf16.gmra.mrb[0].mxu0 %v361
        %v654 = vpop.f32.mrb[0].mxu0
        %v655 = vadd.f32 %v383, %v654
        %v656 = vpop.f32.mrb[0].mxu0
        %v657 = vadd.f32 %v387, %v656
        %v658 = vpop.f32.mrb[0].mxu0
        %v659 = vadd.f32 %v383, %v658
        %v660 = vpop.f32.mrb[0].mxu0
        %v661 = vadd.f32 %v387, %v660
        %662 = vdwg.mxu0
        %v663 = vmax.f32 %v505, 0.0
        %v664 = vmax.f32 %v507, 0.0
        %v665 = vmax.f32 %v509, 0.0
        %v666 = vmax.f32 %v511, 0.0
        %v667 = vmax.f32 %v515, 0.0
        %v668 = vmax.f32 %v517, 0.0
        %v669 = vmax.f32 %v519, 0.0
        %v670 = vmax.f32 %v521, 0.0
        %v671 = vmax.f32 %v525, 0.0
        %v672 = vmax.f32 %v527, 0.0
        %v673 = vmax.f32 %v529, 0.0
        %v674 = vmax.f32 %v531, 0.0
        %v675 = vmax.f32 %v535, 0.0
        %v676 = vmax.f32 %v537, 0.0
        %v677 = vmax.f32 %v539, 0.0
        %v678 = vmax.f32 %v541, 0.0
        %v679 = vmax.f32 %v545, 0.0
        %v680 = vmax.f32 %v547, 0.0
        %v681 = vmax.f32 %v549, 0.0
        %v682 = vmax.f32 %v551, 0.0
        %v683 = vmax.f32 %v555, 0.0
        %v684 = vmax.f32 %v557, 0.0
        %v685 = vmax.f32 %v559, 0.0
        %v686 = vmax.f32 %v561, 0.0
        %v687 = vmax.f32 %v565, 0.0
        %v688 = vmax.f32 %v567, 0.0
        %v689 = vmax.f32 %v569, 0.0
        %v690 = vmax.f32 %v571, 0.0
        %v691 = vmax.f32 %v575, 0.0
        %v692 = vmax.f32 %v577, 0.0
        %v693 = vmax.f32 %v579, 0.0
        %v694 = vmax.f32 %v581, 0.0
        %v695 = vmax.f32 %v585, 0.0
        %v696 = vmax.f32 %v587, 0.0
        %v697 = vmax.f32 %v589, 0.0
        %v698 = vmax.f32 %v591, 0.0
        %v699 = vmax.f32 %v595, 0.0
        %v700 = vmax.f32 %v597, 0.0
        %v701 = vmax.f32 %v599, 0.0
        %v702 = vmax.f32 %v601, 0.0
        %v703 = vmax.f32 %v605, 0.0
        %v704 = vmax.f32 %v607, 0.0
        %v705 = vmax.f32 %v609, 0.0
        %v706 = vmax.f32 %v611, 0.0
        %v707 = vmax.f32 %v615, 0.0
        %v708 = vmax.f32 %v617, 0.0
        %v709 = vmax.f32 %v619, 0.0
        %v710 = vmax.f32 %v621, 0.0
        %v711 = vmax.f32 %v625, 0.0
        %v712 = vmax.f32 %v627, 0.0
        %v713 = vmax.f32 %v629, 0.0
        %v714 = vmax.f32 %v631, 0.0
        %v715 = vmax.f32 %v635, 0.0
        %v716 = vmax.f32 %v637, 0.0
        %v717 = vmax.f32 %v639, 0.0
        %v718 = vmax.f32 %v641, 0.0
        %v719 = vmax.f32 %v645, 0.0
        %v720 = vmax.f32 %v647, 0.0
        %v721 = vmax.f32 %v649, 0.0
        %v722 = vmax.f32 %v651, 0.0
        %v723 = vmax.f32 %v655, 0.0
        %v724 = vmax.f32 %v657, 0.0
        %v725 = vmax.f32 %v659, 0.0
        %v726 = vmax.f32 %v661, 0.0
        %v727 = vpack.c.bf16 %v665, %v663
        %v728 = vpack.c.bf16 %v666, %v664
        %v729 = vpack.c.bf16 %v669, %v667
        %v730 = vpack.c.bf16 %v670, %v668
        %v731 = vpack.c.bf16 %v673, %v671
        %v732 = vpack.c.bf16 %v674, %v672
        %v733 = vpack.c.bf16 %v677, %v675
        %v734 = vpack.c.bf16 %v678, %v676
        %v735 = vpack.c.bf16 %v681, %v679
        %v736 = vpack.c.bf16 %v682, %v680
        %v737 = vpack.c.bf16 %v685, %v683
        %v738 = vpack.c.bf16 %v686, %v684
        %v739 = vpack.c.bf16 %v689, %v687
        %v740 = vpack.c.bf16 %v690, %v688
        %v741 = vpack.c.bf16 %v693, %v691
        %v742 = vpack.c.bf16 %v694, %v692
        %v743 = vpack.c.bf16 %v697, %v695
        %v744 = vpack.c.bf16 %v698, %v696
        %v745 = vpack.c.bf16 %v701, %v699
        %v746 = vpack.c.bf16 %v702, %v700
        %v747 = vpack.c.bf16 %v705, %v703
        %v748 = vpack.c.bf16 %v706, %v704
        %v749 = vpack.c.bf16 %v709, %v707
        %v750 = vpack.c.bf16 %v710, %v708
        %v751 = vpack.c.bf16 %v713, %v711
        %v752 = vpack.c.bf16 %v714, %v712
        %v753 = vpack.c.bf16 %v717, %v715
        %v754 = vpack.c.bf16 %v718, %v716
        %v755 = vpack.c.bf16 %v721, %v719
        %v756 = vpack.c.bf16 %v722, %v720
        %v757 = vpack.c.bf16 %v725, %v723
        %v758 = vpack.c.bf16 %v726, %v724
        %v759 = vld [vmem:[#allocation7] sm:$0xff]
        %v760 = vld [vmem:[#allocation7 + $0x8] sm:$0xff]
        %v761 = vld [vmem:[#allocation7 + $0x10] sm:$0xff]
        %v762 = vld [vmem:[#allocation7 + $0x18] sm:$0xff]
        %v763 = vld [vmem:[#allocation7 + $0x20] sm:$0xff]
        %v764 = vld [vmem:[#allocation7 + $0x28] sm:$0xff]
        %v765 = vld [vmem:[#allocation7 + $0x30] sm:$0xff]
        %v766 = vld [vmem:[#allocation7 + $0x38] sm:$0xff]
        %v767 = vld [vmem:[#allocation7 + $0x40] sm:$0xff]
        %v768 = vld [vmem:[#allocation7 + $0x48] sm:$0xff]
        %v769 = vld [vmem:[#allocation7 + $0x50] sm:$0xff]
        %v770 = vld [vmem:[#allocation7 + $0x58] sm:$0xff]
        %v771 = vld [vmem:[#allocation7 + $0x60] sm:$0xff]
        %v772 = vld [vmem:[#allocation7 + $0x68] sm:$0xff]
        %v773 = vld [vmem:[#allocation7 + $0x70] sm:$0xff]
        %v774 = vld [vmem:[#allocation7 + $0x78] sm:$0xff]
        %v775 = vld [vmem:[#allocation7 + $0x80] sm:$0xff]
        %v776 = vld [vmem:[#allocation7 + $0x88] sm:$0xff]
        %v777 = vld [vmem:[#allocation7 + $0x90] sm:$0xff]
        %v778 = vld [vmem:[#allocation7 + $0x98] sm:$0xff]
        %v779 = vld [vmem:[#allocation7 + $0xa0] sm:$0xff]
        %v780 = vld [vmem:[#allocation7 + $0xa8] sm:$0xff]
        %v781 = vld [vmem:[#allocation7 + $0xb0] sm:$0xff]
        %v782 = vld [vmem:[#allocation7 + $0xb8] sm:$0xff]
        %v783 = vld [vmem:[#allocation7 + $0xc0] sm:$0xff]
        %v784 = vld [vmem:[#allocation7 + $0xc8] sm:$0xff]
        %v785 = vld [vmem:[#allocation7 + $0xd0] sm:$0xff]
        %v786 = vld [vmem:[#allocation7 + $0xd8] sm:$0xff]
        %v787 = vld [vmem:[#allocation7 + $0xe0] sm:$0xff]
        %v788 = vld [vmem:[#allocation7 + $0xe8] sm:$0xff]
        %v789 = vld [vmem:[#allocation7 + $0xf0] sm:$0xff]
        %v790 = vld [vmem:[#allocation7 + $0xf8] sm:$0xff]
        %v791 = vld [vmem:[%s4] sm:$0x3]
        %v793 = vlaneseq
        %v794 = vshrl.u32 %v793, 7
        %v795 = vsub.s32 0, %v794
        %v796 = vrot.slane %v791, %v795
        %v797 = vlaneseq
        %v798 = vshrl.u32 %v797, 7
        %v799 = vsub.s32 1, %v798
        %v800 = vrot.slane %v791, %v799
        %v835 = vunpack.c.l.b16 %v759
        %v836 = vunpack.c.h.b16 %v759
        %v837 = vunpack.c.l.b16 %v760
        %v838 = vunpack.c.h.b16 %v760
        %v839 = vunpack.c.l.b16 %v761
        %v840 = vunpack.c.h.b16 %v761
        %v841 = vunpack.c.l.b16 %v762
        %v842 = vunpack.c.h.b16 %v762
        %v843 = vunpack.c.l.b16 %v763
        %v844 = vunpack.c.h.b16 %v763
        %v845 = vunpack.c.l.b16 %v764
        %v846 = vunpack.c.h.b16 %v764
        %v847 = vunpack.c.l.b16 %v765
        %v848 = vunpack.c.h.b16 %v765
        %v849 = vunpack.c.l.b16 %v766
        %v850 = vunpack.c.h.b16 %v766
        %v851 = vunpack.c.l.b16 %v767
        %v852 = vunpack.c.h.b16 %v767
        %v853 = vunpack.c.l.b16 %v768
        %v854 = vunpack.c.h.b16 %v768
        %v855 = vunpack.c.l.b16 %v769
        %v856 = vunpack.c.h.b16 %v769
        %v857 = vunpack.c.l.b16 %v770
        %v858 = vunpack.c.h.b16 %v770
        %v859 = vunpack.c.l.b16 %v771
        %v860 = vunpack.c.h.b16 %v771
        %v861 = vunpack.c.l.b16 %v772
        %v862 = vunpack.c.h.b16 %v772
        %v863 = vunpack.c.l.b16 %v773
        %v864 = vunpack.c.h.b16 %v773
        %v865 = vunpack.c.l.b16 %v774
        %v866 = vunpack.c.h.b16 %v774
        %v867 = vunpack.c.l.b16 %v775
        %v868 = vunpack.c.h.b16 %v775
        %v869 = vunpack.c.l.b16 %v776
        %v870 = vunpack.c.h.b16 %v776
        %v871 = vunpack.c.l.b16 %v777
        %v872 = vunpack.c.h.b16 %v777
        %v873 = vunpack.c.l.b16 %v778
        %v874 = vunpack.c.h.b16 %v778
        %v875 = vunpack.c.l.b16 %v779
        %v876 = vunpack.c.h.b16 %v779
        %v877 = vunpack.c.l.b16 %v780
        %v878 = vunpack.c.h.b16 %v780
        %v879 = vunpack.c.l.b16 %v781
        %v880 = vunpack.c.h.b16 %v781
        %v881 = vunpack.c.l.b16 %v782
        %v882 = vunpack.c.h.b16 %v782
        %v883 = vunpack.c.l.b16 %v783
        %v884 = vunpack.c.h.b16 %v783
        %v885 = vunpack.c.l.b16 %v784
        %v886 = vunpack.c.h.b16 %v784
        %v887 = vunpack.c.l.b16 %v785
        %v888 = vunpack.c.h.b16 %v785
        %v889 = vunpack.c.l.b16 %v786
        %v890 = vunpack.c.h.b16 %v786
        %v891 = vunpack.c.l.b16 %v787
        %v892 = vunpack.c.h.b16 %v787
        %v893 = vunpack.c.l.b16 %v788
        %v894 = vunpack.c.h.b16 %v788
        %v895 = vunpack.c.l.b16 %v789
        %v896 = vunpack.c.h.b16 %v789
        %v897 = vunpack.c.l.b16 %v790
        %v898 = vunpack.c.h.b16 %v790
        %v899 = vpack.c.b16 %v837, %v835
        %v900 = vpack.c.b16 %v838, %v836
        %v901 = vpack.c.b16 %v841, %v839
        %v902 = vpack.c.b16 %v842, %v840
        %v903 = vpack.c.b16 %v845, %v843
        %v904 = vpack.c.b16 %v846, %v844
        %v905 = vpack.c.b16 %v849, %v847
        %v906 = vpack.c.b16 %v850, %v848
        %v907 = vpack.c.b16 %v853, %v851
        %v908 = vpack.c.b16 %v854, %v852
        %v909 = vpack.c.b16 %v857, %v855
        %v910 = vpack.c.b16 %v858, %v856
        %v911 = vpack.c.b16 %v861, %v859
        %v912 = vpack.c.b16 %v862, %v860
        %v913 = vpack.c.b16 %v865, %v863
        %v914 = vpack.c.b16 %v866, %v864
        %v915 = vpack.c.b16 %v869, %v867
        %v916 = vpack.c.b16 %v870, %v868
        %v917 = vpack.c.b16 %v873, %v871
        %v918 = vpack.c.b16 %v874, %v872
        %v919 = vpack.c.b16 %v877, %v875
        %v920 = vpack.c.b16 %v878, %v876
        %v921 = vpack.c.b16 %v881, %v879
        %v922 = vpack.c.b16 %v882, %v880
        %v923 = vpack.c.b16 %v885, %v883
        %v924 = vpack.c.b16 %v886, %v884
        %v925 = vpack.c.b16 %v889, %v887
        %v926 = vpack.c.b16 %v890, %v888
        %v927 = vpack.c.b16 %v893, %v891
        %v928 = vpack.c.b16 %v894, %v892
        %v929 = vpack.c.b16 %v897, %v895
        %v930 = vpack.c.b16 %v898, %v896
        %963 = vmatprep.subr.bf16.mxu0 %v900
        %964 = vmatpush1.bf16.msra.mxu0 %v899
        %965 = vmatprep.subr.bf16.mxu0 %v902
        %966 = vmatpush1.bf16.msra.mxu0 %v901
        %967 = vmatprep.subr.bf16.mxu0 %v904
        %968 = vmatpush1.bf16.msra.mxu0 %v903
        %969 = vmatprep.subr.bf16.mxu0 %v906
        %970 = vmatpush1.bf16.msra.mxu0 %v905
        %971 = vmatprep.subr.bf16.mxu0 %v908
        %972 = vmatpush1.bf16.msra.mxu0 %v907
        %973 = vmatprep.subr.bf16.mxu0 %v910
        %974 = vmatpush1.bf16.msra.mxu0 %v909
        %975 = vmatprep.subr.bf16.mxu0 %v912
        %976 = vmatpush1.bf16.msra.mxu0 %v911
        %977 = vmatprep.subr.bf16.mxu0 %v914
        %978 = vmatpush1.bf16.msra.mxu0 %v913
        %979 = vmatprep.subr.bf16.mxu0 %v916
        %980 = vmatpush1.bf16.msra.mxu0 %v915
        %981 = vmatprep.subr.bf16.mxu0 %v918
        %982 = vmatpush1.bf16.msra.mxu0 %v917
        %983 = vmatprep.subr.bf16.mxu0 %v920
        %984 = vmatpush1.bf16.msra.mxu0 %v919
        %985 = vmatprep.subr.bf16.mxu0 %v922
        %986 = vmatpush1.bf16.msra.mxu0 %v921
        %987 = vmatprep.subr.bf16.mxu0 %v924
        %988 = vmatpush1.bf16.msra.mxu0 %v923
        %989 = vmatprep.subr.bf16.mxu0 %v926
        %990 = vmatpush1.bf16.msra.mxu0 %v925
        %991 = vmatprep.subr.bf16.mxu0 %v928
        %992 = vmatpush1.bf16.msra.mxu0 %v927
        %993 = vmatprep.subr.bf16.mxu0 %v930
        %994 = vmatpush1.bf16.msra.mxu0 %v929
        %995 = vmatprep.mubr.bf16.mxu0 %v728
        %996 = vmatmul.mubr.bf16.gmra.mrb[0].mxu0 %v727
        %v997 = vpop.f32.mrb[0].mxu0
        %v998 = vadd.f32 %v796, %v997
        %v999 = vpop.f32.mrb[0].mxu0
        %v1000 = vadd.f32 %v800, %v999
        %v1001 = vpop.f32.mrb[0].mxu0
        %v1002 = vadd.f32 %v796, %v1001
        %v1003 = vpop.f32.mrb[0].mxu0
        %v1004 = vadd.f32 %v800, %v1003
        %1005 = vmatprep.mubr.bf16.mxu0 %v730
        %1006 = vmatmul.mubr.bf16.gmra.mrb[0].mxu0 %v729
        %v1007 = vpop.f32.mrb[0].mxu0
        %v1008 = vadd.f32 %v796, %v1007
        %v1009 = vpop.f32.mrb[0].mxu0
        %v1010 = vadd.f32 %v800, %v1009
        %v1011 = vpop.f32.mrb[0].mxu0
        %v1012 = vadd.f32 %v796, %v1011
        %v1013 = vpop.f32.mrb[0].mxu0
        %v1014 = vadd.f32 %v800, %v1013
        %1015 = vmatprep.mubr.bf16.mxu0 %v732
        %1016 = vmatmul.mubr.bf16.gmra.mrb[0].mxu0 %v731
        %v1017 = vpop.f32.mrb[0].mxu0
        %v1018 = vadd.f32 %v796, %v1017
        %v1019 = vpop.f32.mrb[0].mxu0
        %v1020 = vadd.f32 %v800, %v1019
        %v1021 = vpop.f32.mrb[0].mxu0
        %v1022 = vadd.f32 %v796, %v1021
        %v1023 = vpop.f32.mrb[0].mxu0
        %v1024 = vadd.f32 %v800, %v1023
        %1025 = vmatprep.mubr.bf16.mxu0 %v734
        %1026 = vmatmul.mubr.bf16.gmra.mrb[0].mxu0 %v733
        %v1027 = vpop.f32.mrb[0].mxu0
        %v1028 = vadd.f32 %v796, %v1027
        %v1029 = vpop.f32.mrb[0].mxu0
        %v1030 = vadd.f32 %v800, %v1029
        %v1031 = vpop.f32.mrb[0].mxu0
        %v1032 = vadd.f32 %v796, %v1031
        %v1033 = vpop.f32.mrb[0].mxu0
        %v1034 = vadd.f32 %v800, %v1033
        %1035 = vmatprep.mubr.bf16.mxu0 %v736
        %1036 = vmatmul.mubr.bf16.gmra.mrb[0].mxu0 %v735
        %v1037 = vpop.f32.mrb[0].mxu0
        %v1038 = vadd.f32 %v796, %v1037
        %v1039 = vpop.f32.mrb[0].mxu0
        %v1040 = vadd.f32 %v800, %v1039
        %v1041 = vpop.f32.mrb[0].mxu0
        %v1042 = vadd.f32 %v796, %v1041
        %v1043 = vpop.f32.mrb[0].mxu0
        %v1044 = vadd.f32 %v800, %v1043
        %1045 = vmatprep.mubr.bf16.mxu0 %v738
        %1046 = vmatmul.mubr.bf16.gmra.mrb[0].mxu0 %v737
        %v1047 = vpop.f32.mrb[0].mxu0
        %v1048 = vadd.f32 %v796, %v1047
        %v1049 = vpop.f32.mrb[0].mxu0
        %v1050 = vadd.f32 %v800, %v1049
        %v1051 = vpop.f32.mrb[0].mxu0
        %v1052 = vadd.f32 %v796, %v1051
        %v1053 = vpop.f32.mrb[0].mxu0
        %v1054 = vadd.f32 %v800, %v1053
        %1055 = vmatprep.mubr.bf16.mxu0 %v740
        %1056 = vmatmul.mubr.bf16.gmra.mrb[0].mxu0 %v739
        %v1057 = vpop.f32.mrb[0].mxu0
        %v1058 = vadd.f32 %v796, %v1057
        %v1059 = vpop.f32.mrb[0].mxu0
        %v1060 = vadd.f32 %v800, %v1059
        %v1061 = vpop.f32.mrb[0].mxu0
        %v1062 = vadd.f32 %v796, %v1061
        %v1063 = vpop.f32.mrb[0].mxu0
        %v1064 = vadd.f32 %v800, %v1063
        %1065 = vmatprep.mubr.bf16.mxu0 %v742
        %1066 = vmatmul.mubr.bf16.gmra.mrb[0].mxu0 %v741
        %v1067 = vpop.f32.mrb[0].mxu0
        %v1068 = vadd.f32 %v796, %v1067
        %v1069 = vpop.f32.mrb[0].mxu0
        %v1070 = vadd.f32 %v800, %v1069
        %v1071 = vpop.f32.mrb[0].mxu0
        %v1072 = vadd.f32 %v796, %v1071
        %v1073 = vpop.f32.mrb[0].mxu0
        %v1074 = vadd.f32 %v800, %v1073
        %1075 = vmatprep.mubr.bf16.mxu0 %v744
        %1076 = vmatmul.mubr.bf16.gmra.mrb[0].mxu0 %v743
        %v1077 = vpop.f32.mrb[0].mxu0
        %v1078 = vadd.f32 %v796, %v1077
        %v1079 = vpop.f32.mrb[0].mxu0
        %v1080 = vadd.f32 %v800, %v1079
        %v1081 = vpop.f32.mrb[0].mxu0
        %v1082 = vadd.f32 %v796, %v1081
        %v1083 = vpop.f32.mrb[0].mxu0
        %v1084 = vadd.f32 %v800, %v1083
        %1085 = vmatprep.mubr.bf16.mxu0 %v746
        %1086 = vmatmul.mubr.bf16.gmra.mrb[0].mxu0 %v745
        %v1087 = vpop.f32.mrb[0].mxu0
        %v1088 = vadd.f32 %v796, %v1087
        %v1089 = vpop.f32.mrb[0].mxu0
        %v1090 = vadd.f32 %v800, %v1089
        %v1091 = vpop.f32.mrb[0].mxu0
        %v1092 = vadd.f32 %v796, %v1091
        %v1093 = vpop.f32.mrb[0].mxu0
        %v1094 = vadd.f32 %v800, %v1093
        %1095 = vmatprep.mubr.bf16.mxu0 %v748
        %1096 = vmatmul.mubr.bf16.gmra.mrb[0].mxu0 %v747
        %v1097 = vpop.f32.mrb[0].mxu0
        %v1098 = vadd.f32 %v796, %v1097
        %v1099 = vpop.f32.mrb[0].mxu0
        %v1100 = vadd.f32 %v800, %v1099
        %v1101 = vpop.f32.mrb[0].mxu0
        %v1102 = vadd.f32 %v796, %v1101
        %v1103 = vpop.f32.mrb[0].mxu0
        %v1104 = vadd.f32 %v800, %v1103
        %1105 = vmatprep.mubr.bf16.mxu0 %v750
        %1106 = vmatmul.mubr.bf16.gmra.mrb[0].mxu0 %v749
        %v1107 = vpop.f32.mrb[0].mxu0
        %v1108 = vadd.f32 %v796, %v1107
        %v1109 = vpop.f32.mrb[0].mxu0
        %v1110 = vadd.f32 %v800, %v1109
        %v1111 = vpop.f32.mrb[0].mxu0
        %v1112 = vadd.f32 %v796, %v1111
        %v1113 = vpop.f32.mrb[0].mxu0
        %v1114 = vadd.f32 %v800, %v1113
        %1115 = vmatprep.mubr.bf16.mxu0 %v752
        %1116 = vmatmul.mubr.bf16.gmra.mrb[0].mxu0 %v751
        %v1117 = vpop.f32.mrb[0].mxu0
        %v1118 = vadd.f32 %v796, %v1117
        %v1119 = vpop.f32.mrb[0].mxu0
        %v1120 = vadd.f32 %v800, %v1119
        %v1121 = vpop.f32.mrb[0].mxu0
        %v1122 = vadd.f32 %v796, %v1121
        %v1123 = vpop.f32.mrb[0].mxu0
        %v1124 = vadd.f32 %v800, %v1123
        %1125 = vmatprep.mubr.bf16.mxu0 %v754
        %1126 = vmatmul.mubr.bf16.gmra.mrb[0].mxu0 %v753
        %v1127 = vpop.f32.mrb[0].mxu0
        %v1128 = vadd.f32 %v796, %v1127
        %v1129 = vpop.f32.mrb[0].mxu0
        %v1130 = vadd.f32 %v800, %v1129
        %v1131 = vpop.f32.mrb[0].mxu0
        %v1132 = vadd.f32 %v796, %v1131
        %v1133 = vpop.f32.mrb[0].mxu0
        %v1134 = vadd.f32 %v800, %v1133
        %1135 = vmatprep.mubr.bf16.mxu0 %v756
        %1136 = vmatmul.mubr.bf16.gmra.mrb[0].mxu0 %v755
        %v1137 = vpop.f32.mrb[0].mxu0
        %v1138 = vadd.f32 %v796, %v1137
        %v1139 = vpop.f32.mrb[0].mxu0
        %v1140 = vadd.f32 %v800, %v1139
        %v1141 = vpop.f32.mrb[0].mxu0
        %v1142 = vadd.f32 %v796, %v1141
        %v1143 = vpop.f32.mrb[0].mxu0
        %v1144 = vadd.f32 %v800, %v1143
        %1145 = vmatprep.mubr.bf16.mxu0 %v758
        %1146 = vmatmul.mubr.bf16.gmra.mrb[0].mxu0 %v757
        %v1147 = vpop.f32.mrb[0].mxu0
        %v1148 = vadd.f32 %v796, %v1147
        %v1149 = vpop.f32.mrb[0].mxu0
        %v1150 = vadd.f32 %v800, %v1149
        %v1151 = vpop.f32.mrb[0].mxu0
        %v1152 = vadd.f32 %v796, %v1151
        %v1153 = vpop.f32.mrb[0].mxu0
        %v1154 = vadd.f32 %v800, %v1153
        %1155 = vdwg.mxu0
        %1156 = vst [vmem:[%s302] sm:$0xff] %v998
        %1157 = vst [vmem:[%s302 + $0x8] sm:$0xff] %v1002
        %1158 = vst [vmem:[%s302 + $0x10] sm:$0xff] %v1008
        %1159 = vst [vmem:[%s302 + $0x18] sm:$0xff] %v1012
        %1160 = vst [vmem:[%s302 + $0x20] sm:$0xff] %v1018
        %1161 = vst [vmem:[%s302 + $0x28] sm:$0xff] %v1022
        %1162 = vst [vmem:[%s302 + $0x30] sm:$0xff] %v1028
        %1163 = vst [vmem:[%s302 + $0x38] sm:$0xff] %v1032
        %1164 = vst [vmem:[%s302 + $0x40] sm:$0xff] %v1038
        %1165 = vst [vmem:[%s302 + $0x48] sm:$0xff] %v1042
        %1166 = vst [vmem:[%s302 + $0x50] sm:$0xff] %v1048
        %1167 = vst [vmem:[%s302 + $0x58] sm:$0xff] %v1052
        %1168 = vst [vmem:[%s302 + $0x60] sm:$0xff] %v1058
        %1169 = vst [vmem:[%s302 + $0x68] sm:$0xff] %v1062
        %1170 = vst [vmem:[%s302 + $0x70] sm:$0xff] %v1068
        %1171 = vst [vmem:[%s302 + $0x78] sm:$0xff] %v1072
        %1172 = vst [vmem:[%s302 + $0x80] sm:$0xff] %v1078
        %1173 = vst [vmem:[%s302 + $0x88] sm:$0xff] %v1082
        %1174 = vst [vmem:[%s302 + $0x90] sm:$0xff] %v1088
        %1175 = vst [vmem:[%s302 + $0x98] sm:$0xff] %v1092
        %1176 = vst [vmem:[%s302 + $0xa0] sm:$0xff] %v1098
        %1177 = vst [vmem:[%s302 + $0xa8] sm:$0xff] %v1102
        %1178 = vst [vmem:[%s302 + $0xb0] sm:$0xff] %v1108
        %1179 = vst [vmem:[%s302 + $0xb8] sm:$0xff] %v1112
        %1180 = vst [vmem:[%s302 + $0xc0] sm:$0xff] %v1118
        %1181 = vst [vmem:[%s302 + $0xc8] sm:$0xff] %v1122
        %1182 = vst [vmem:[%s302 + $0xd0] sm:$0xff] %v1128
        %1183 = vst [vmem:[%s302 + $0xd8] sm:$0xff] %v1132
        %1184 = vst [vmem:[%s302 + $0xe0] sm:$0xff] %v1138
        %1185 = vst [vmem:[%s302 + $0xe8] sm:$0xff] %v1142
        %1186 = vst [vmem:[%s302 + $0xf0] sm:$0xff] %v1148
        %1187 = vst [vmem:[%s302 + $0xf8] sm:$0xff] %v1152
        %v1188 = vmax.f32 %v1000, 0.0
        %v1189 = vmax.f32 %v1004, 0.0
        %v1190 = vmax.f32 %v1010, 0.0
        %v1191 = vmax.f32 %v1014, 0.0
        %v1192 = vmax.f32 %v1020, 0.0
        %v1193 = vmax.f32 %v1024, 0.0
        %v1194 = vmax.f32 %v1030, 0.0
        %v1195 = vmax.f32 %v1034, 0.0
        %v1196 = vmax.f32 %v1040, 0.0
        %v1197 = vmax.f32 %v1044, 0.0
        %v1198 = vmax.f32 %v1050, 0.0
        %v1199 = vmax.f32 %v1054, 0.0
        %v1200 = vmax.f32 %v1060, 0.0
        %v1201 = vmax.f32 %v1064, 0.0
        %v1202 = vmax.f32 %v1070, 0.0
        %v1203 = vmax.f32 %v1074, 0.0
        %v1204 = vmax.f32 %v1080, 0.0
        %v1205 = vmax.f32 %v1084, 0.0
        %v1206 = vmax.f32 %v1090, 0.0
        %v1207 = vmax.f32 %v1094, 0.0
        %v1208 = vmax.f32 %v1100, 0.0
        %v1209 = vmax.f32 %v1104, 0.0
        %v1210 = vmax.f32 %v1110, 0.0
        %v1211 = vmax.f32 %v1114, 0.0
        %v1212 = vmax.f32 %v1120, 0.0
        %v1213 = vmax.f32 %v1124, 0.0
        %v1214 = vmax.f32 %v1130, 0.0
        %v1215 = vmax.f32 %v1134, 0.0
        %v1216 = vmax.f32 %v1140, 0.0
        %v1217 = vmax.f32 %v1144, 0.0
        %v1218 = vmax.f32 %v1150, 0.0
        %v1219 = vmax.f32 %v1154, 0.0
        %v1220 = vand.u32 2147483647, %v1000
        %v1221 = vand.u32 2147483647, %v1004
        %v1222 = vand.u32 2147483647, %v1010
        %v1223 = vand.u32 2147483647, %v1014
        %v1224 = vand.u32 2147483647, %v1020
        %v1225 = vand.u32 2147483647, %v1024
        %v1226 = vand.u32 2147483647, %v1030
        %v1227 = vand.u32 2147483647, %v1034
        %v1228 = vand.u32 2147483647, %v1040
        %v1229 = vand.u32 2147483647, %v1044
        %v1230 = vand.u32 2147483647, %v1050
        %v1231 = vand.u32 2147483647, %v1054
        %v1232 = vand.u32 2147483647, %v1060
        %v1233 = vand.u32 2147483647, %v1064
        %v1234 = vand.u32 2147483647, %v1070
        %v1235 = vand.u32 2147483647, %v1074
        %v1236 = vand.u32 2147483647, %v1080
        %v1237 = vand.u32 2147483647, %v1084
        %v1238 = vand.u32 2147483647, %v1090
        %v1239 = vand.u32 2147483647, %v1094
        %v1240 = vand.u32 2147483647, %v1100
        %v1241 = vand.u32 2147483647, %v1104
        %v1242 = vand.u32 2147483647, %v1110
        %v1243 = vand.u32 2147483647, %v1114
        %v1244 = vand.u32 2147483647, %v1120
        %v1245 = vand.u32 2147483647, %v1124
        %v1246 = vand.u32 2147483647, %v1130
        %v1247 = vand.u32 2147483647, %v1134
        %v1248 = vand.u32 2147483647, %v1140
        %v1249 = vand.u32 2147483647, %v1144
        %v1250 = vand.u32 2147483647, %v1150
        %v1251 = vand.u32 2147483647, %v1154
        %v1252 = vsub.f32 0.0, %v1220
        %v1253 = vsub.f32 0.0, %v1221
        %v1254 = vsub.f32 0.0, %v1222
        %v1255 = vsub.f32 0.0, %v1223
        %v1256 = vsub.f32 0.0, %v1224
        %v1257 = vsub.f32 0.0, %v1225
        %v1258 = vsub.f32 0.0, %v1226
        %v1259 = vsub.f32 0.0, %v1227
        %v1260 = vsub.f32 0.0, %v1228
        %v1261 = vsub.f32 0.0, %v1229
        %v1262 = vsub.f32 0.0, %v1230
        %v1263 = vsub.f32 0.0, %v1231
        %v1264 = vsub.f32 0.0, %v1232
        %v1265 = vsub.f32 0.0, %v1233
        %v1266 = vsub.f32 0.0, %v1234
        %v1267 = vsub.f32 0.0, %v1235
        %v1268 = vsub.f32 0.0, %v1236
        %v1269 = vsub.f32 0.0, %v1237
        %v1270 = vsub.f32 0.0, %v1238
        %v1271 = vsub.f32 0.0, %v1239
        %v1272 = vsub.f32 0.0, %v1240
        %v1273 = vsub.f32 0.0, %v1241
        %v1274 = vsub.f32 0.0, %v1242
        %v1275 = vsub.f32 0.0, %v1243
        %v1276 = vsub.f32 0.0, %v1244
        %v1277 = vsub.f32 0.0, %v1245
        %v1278 = vsub.f32 0.0, %v1246
        %v1279 = vsub.f32 0.0, %v1247
        %v1280 = vsub.f32 0.0, %v1248
        %v1281 = vsub.f32 0.0, %v1249
        %v1282 = vsub.f32 0.0, %v1250
        %v1283 = vsub.f32 0.0, %v1251
        %v1284 = vmul.f32 %v1252, 1.442695
        %v1285 = vpow.pop %v1284
        %v1286 = vmul.f32 %v1253, 1.442695
        %v1287 = vpow.pop %v1286
        %v1288 = vmul.f32 %v1254, 1.442695
        %v1289 = vpow.pop %v1288
        %v1290 = vmul.f32 %v1255, 1.442695
        %v1291 = vpow.pop %v1290
        %v1292 = vmul.f32 %v1256, 1.442695
        %v1293 = vpow.pop %v1292
        %v1294 = vmul.f32 %v1257, 1.442695
        %v1295 = vpow.pop %v1294
        %v1296 = vmul.f32 %v1258, 1.442695
        %v1297 = vpow.pop %v1296
        %v1298 = vmul.f32 %v1259, 1.442695
        %v1299 = vpow.pop %v1298
        %v1300 = vmul.f32 %v1260, 1.442695
        %v1301 = vpow.pop %v1300
        %v1302 = vmul.f32 %v1261, 1.442695
        %v1303 = vpow.pop %v1302
        %v1304 = vmul.f32 %v1262, 1.442695
        %v1305 = vpow.pop %v1304
        %v1306 = vmul.f32 %v1263, 1.442695
        %v1307 = vpow.pop %v1306
        %v1308 = vmul.f32 %v1264, 1.442695
        %v1309 = vpow.pop %v1308
        %v1310 = vmul.f32 %v1265, 1.442695
        %v1311 = vpow.pop %v1310
        %v1312 = vmul.f32 %v1266, 1.442695
        %v1313 = vpow.pop %v1312
        %v1314 = vmul.f32 %v1267, 1.442695
        %v1315 = vpow.pop %v1314
        %v1316 = vmul.f32 %v1268, 1.442695
        %v1317 = vpow.pop %v1316
        %v1318 = vmul.f32 %v1269, 1.442695
        %v1319 = vpow.pop %v1318
        %v1320 = vmul.f32 %v1270, 1.442695
        %v1321 = vpow.pop %v1320
        %v1322 = vmul.f32 %v1271, 1.442695
        %v1323 = vpow.pop %v1322
        %v1324 = vmul.f32 %v1272, 1.442695
        %v1325 = vpow.pop %v1324
        %v1326 = vmul.f32 %v1273, 1.442695
        %v1327 = vpow.pop %v1326
        %v1328 = vmul.f32 %v1274, 1.442695
        %v1329 = vpow.pop %v1328
        %v1330 = vmul.f32 %v1275, 1.442695
        %v1331 = vpow.pop %v1330
        %v1332 = vmul.f32 %v1276, 1.442695
        %v1333 = vpow.pop %v1332
        %v1334 = vmul.f32 %v1277, 1.442695
        %v1335 = vpow.pop %v1334
        %v1336 = vmul.f32 %v1278, 1.442695
        %v1337 = vpow.pop %v1336
        %v1338 = vmul.f32 %v1279, 1.442695
        %v1339 = vpow.pop %v1338
        %v1340 = vmul.f32 %v1280, 1.442695
        %v1341 = vpow.pop %v1340
        %v1342 = vmul.f32 %v1281, 1.442695
        %v1343 = vpow.pop %v1342
        %v1344 = vmul.f32 %v1282, 1.442695
        %v1345 = vpow.pop %v1344
        %v1346 = vmul.f32 %v1283, 1.442695
        %v1347 = vpow.pop %v1346
        %v1348 = vadd.f32 %v1285, 1.0
        %v1349 = vlog2.pop %v1348
        %v1350 = vmul.f32 %v1349, 0.6931472
        %v1351 = vmul.f32 -0.5, %v1285
        %v1352 = vadd.f32 %v1351, 1.0
        %v1353 = vmul.f32 %v1352, %v1285
        %v1354 = vand.u32 2147483647, %v1285
        %vm1355 = vcmp.lt.f32.partialorder %v1354, 0.0004427343
        %v1356 = vsel %vm1355, %v1353, %v1350
        %v1357 = vadd.f32 %v1287, 1.0
        %v1358 = vlog2.pop %v1357
        %v1359 = vmul.f32 %v1358, 0.6931472
        %v1360 = vmul.f32 -0.5, %v1287
        %v1361 = vadd.f32 %v1360, 1.0
        %v1362 = vmul.f32 %v1361, %v1287
        %v1363 = vand.u32 2147483647, %v1287
        %vm1364 = vcmp.lt.f32.partialorder %v1363, 0.0004427343
        %v1365 = vsel %vm1364, %v1362, %v1359
        %v1366 = vadd.f32 %v1289, 1.0
        %v1367 = vlog2.pop %v1366
        %v1368 = vmul.f32 %v1367, 0.6931472
        %v1369 = vmul.f32 -0.5, %v1289
        %v1370 = vadd.f32 %v1369, 1.0
        %v1371 = vmul.f32 %v1370, %v1289
        %v1372 = vand.u32 2147483647, %v1289
        %vm1373 = vcmp.lt.f32.partialorder %v1372, 0.0004427343
        %v1374 = vsel %vm1373, %v1371, %v1368
        %v1375 = vadd.f32 %v1291, 1.0
        %v1376 = vlog2.pop %v1375
        %v1377 = vmul.f32 %v1376, 0.6931472
        %v1378 = vmul.f32 -0.5, %v1291
        %v1379 = vadd.f32 %v1378, 1.0
        %v1380 = vmul.f32 %v1379, %v1291
        %v1381 = vand.u32 2147483647, %v1291
        %vm1382 = vcmp.lt.f32.partialorder %v1381, 0.0004427343
        %v1383 = vsel %vm1382, %v1380, %v1377
        %v1384 = vadd.f32 %v1293, 1.0
        %v1385 = vlog2.pop %v1384
        %v1386 = vmul.f32 %v1385, 0.6931472
        %v1387 = vmul.f32 -0.5, %v1293
        %v1388 = vadd.f32 %v1387, 1.0
        %v1389 = vmul.f32 %v1388, %v1293
        %v1390 = vand.u32 2147483647, %v1293
        %vm1391 = vcmp.lt.f32.partialorder %v1390, 0.0004427343
        %v1392 = vsel %vm1391, %v1389, %v1386
        %v1393 = vadd.f32 %v1295, 1.0
        %v1394 = vlog2.pop %v1393
        %v1395 = vmul.f32 %v1394, 0.6931472
        %v1396 = vmul.f32 -0.5, %v1295
        %v1397 = vadd.f32 %v1396, 1.0
        %v1398 = vmul.f32 %v1397, %v1295
        %v1399 = vand.u32 2147483647, %v1295
        %vm1400 = vcmp.lt.f32.partialorder %v1399, 0.0004427343
        %v1401 = vsel %vm1400, %v1398, %v1395
        %v1402 = vadd.f32 %v1297, 1.0
        %v1403 = vlog2.pop %v1402
        %v1404 = vmul.f32 %v1403, 0.6931472
        %v1405 = vmul.f32 -0.5, %v1297
        %v1406 = vadd.f32 %v1405, 1.0
        %v1407 = vmul.f32 %v1406, %v1297
        %v1408 = vand.u32 2147483647, %v1297
        %vm1409 = vcmp.lt.f32.partialorder %v1408, 0.0004427343
        %v1410 = vsel %vm1409, %v1407, %v1404
        %v1411 = vadd.f32 %v1299, 1.0
        %v1412 = vlog2.pop %v1411
        %v1413 = vmul.f32 %v1412, 0.6931472
        %v1414 = vmul.f32 -0.5, %v1299
        %v1415 = vadd.f32 %v1414, 1.0
        %v1416 = vmul.f32 %v1415, %v1299
        %v1417 = vand.u32 2147483647, %v1299
        %vm1418 = vcmp.lt.f32.partialorder %v1417, 0.0004427343
        %v1419 = vsel %vm1418, %v1416, %v1413
        %v1420 = vadd.f32 %v1301, 1.0
        %v1421 = vlog2.pop %v1420
        %v1422 = vmul.f32 %v1421, 0.6931472
        %v1423 = vmul.f32 -0.5, %v1301
        %v1424 = vadd.f32 %v1423, 1.0
        %v1425 = vmul.f32 %v1424, %v1301
        %v1426 = vand.u32 2147483647, %v1301
        %vm1427 = vcmp.lt.f32.partialorder %v1426, 0.0004427343
        %v1428 = vsel %vm1427, %v1425, %v1422
        %v1429 = vadd.f32 %v1303, 1.0
        %v1430 = vlog2.pop %v1429
        %v1431 = vmul.f32 %v1430, 0.6931472
        %v1432 = vmul.f32 -0.5, %v1303
        %v1433 = vadd.f32 %v1432, 1.0
        %v1434 = vmul.f32 %v1433, %v1303
        %v1435 = vand.u32 2147483647, %v1303
        %vm1436 = vcmp.lt.f32.partialorder %v1435, 0.0004427343
        %v1437 = vsel %vm1436, %v1434, %v1431
        %v1438 = vadd.f32 %v1305, 1.0
        %v1439 = vlog2.pop %v1438
        %v1440 = vmul.f32 %v1439, 0.6931472
        %v1441 = vmul.f32 -0.5, %v1305
        %v1442 = vadd.f32 %v1441, 1.0
        %v1443 = vmul.f32 %v1442, %v1305
        %v1444 = vand.u32 2147483647, %v1305
        %vm1445 = vcmp.lt.f32.partialorder %v1444, 0.0004427343
        %v1446 = vsel %vm1445, %v1443, %v1440
        %v1447 = vadd.f32 %v1307, 1.0
        %v1448 = vlog2.pop %v1447
        %v1449 = vmul.f32 %v1448, 0.6931472
        %v1450 = vmul.f32 -0.5, %v1307
        %v1451 = vadd.f32 %v1450, 1.0
        %v1452 = vmul.f32 %v1451, %v1307
        %v1453 = vand.u32 2147483647, %v1307
        %vm1454 = vcmp.lt.f32.partialorder %v1453, 0.0004427343
        %v1455 = vsel %vm1454, %v1452, %v1449
        %v1456 = vadd.f32 %v1309, 1.0
        %v1457 = vlog2.pop %v1456
        %v1458 = vmul.f32 %v1457, 0.6931472
        %v1459 = vmul.f32 -0.5, %v1309
        %v1460 = vadd.f32 %v1459, 1.0
        %v1461 = vmul.f32 %v1460, %v1309
        %v1462 = vand.u32 2147483647, %v1309
        %vm1463 = vcmp.lt.f32.partialorder %v1462, 0.0004427343
        %v1464 = vsel %vm1463, %v1461, %v1458
        %v1465 = vadd.f32 %v1311, 1.0
        %v1466 = vlog2.pop %v1465
        %v1467 = vmul.f32 %v1466, 0.6931472
        %v1468 = vmul.f32 -0.5, %v1311
        %v1469 = vadd.f32 %v1468, 1.0
        %v1470 = vmul.f32 %v1469, %v1311
        %v1471 = vand.u32 2147483647, %v1311
        %vm1472 = vcmp.lt.f32.partialorder %v1471, 0.0004427343
        %v1473 = vsel %vm1472, %v1470, %v1467
        %v1474 = vadd.f32 %v1313, 1.0
        %v1475 = vlog2.pop %v1474
        %v1476 = vmul.f32 %v1475, 0.6931472
        %v1477 = vmul.f32 -0.5, %v1313
        %v1478 = vadd.f32 %v1477, 1.0
        %v1479 = vmul.f32 %v1478, %v1313
        %v1480 = vand.u32 2147483647, %v1313
        %vm1481 = vcmp.lt.f32.partialorder %v1480, 0.0004427343
        %v1482 = vsel %vm1481, %v1479, %v1476
        %v1483 = vadd.f32 %v1315, 1.0
        %v1484 = vlog2.pop %v1483
        %v1485 = vmul.f32 %v1484, 0.6931472
        %v1486 = vmul.f32 -0.5, %v1315
        %v1487 = vadd.f32 %v1486, 1.0
        %v1488 = vmul.f32 %v1487, %v1315
        %v1489 = vand.u32 2147483647, %v1315
        %vm1490 = vcmp.lt.f32.partialorder %v1489, 0.0004427343
        %v1491 = vsel %vm1490, %v1488, %v1485
        %v1492 = vadd.f32 %v1317, 1.0
        %v1493 = vlog2.pop %v1492
        %v1494 = vmul.f32 %v1493, 0.6931472
        %v1495 = vmul.f32 -0.5, %v1317
        %v1496 = vadd.f32 %v1495, 1.0
        %v1497 = vmul.f32 %v1496, %v1317
        %v1498 = vand.u32 2147483647, %v1317
        %vm1499 = vcmp.lt.f32.partialorder %v1498, 0.0004427343
        %v1500 = vsel %vm1499, %v1497, %v1494
        %v1501 = vadd.f32 %v1319, 1.0
        %v1502 = vlog2.pop %v1501
        %v1503 = vmul.f32 %v1502, 0.6931472
        %v1504 = vmul.f32 -0.5, %v1319
        %v1505 = vadd.f32 %v1504, 1.0
        %v1506 = vmul.f32 %v1505, %v1319
        %v1507 = vand.u32 2147483647, %v1319
        %vm1508 = vcmp.lt.f32.partialorder %v1507, 0.0004427343
        %v1509 = vsel %vm1508, %v1506, %v1503
        %v1510 = vadd.f32 %v1321, 1.0
        %v1511 = vlog2.pop %v1510
        %v1512 = vmul.f32 %v1511, 0.6931472
        %v1513 = vmul.f32 -0.5, %v1321
        %v1514 = vadd.f32 %v1513, 1.0
        %v1515 = vmul.f32 %v1514, %v1321
        %v1516 = vand.u32 2147483647, %v1321
        %vm1517 = vcmp.lt.f32.partialorder %v1516, 0.0004427343
        %v1518 = vsel %vm1517, %v1515, %v1512
        %v1519 = vadd.f32 %v1323, 1.0
        %v1520 = vlog2.pop %v1519
        %v1521 = vmul.f32 %v1520, 0.6931472
        %v1522 = vmul.f32 -0.5, %v1323
        %v1523 = vadd.f32 %v1522, 1.0
        %v1524 = vmul.f32 %v1523, %v1323
        %v1525 = vand.u32 2147483647, %v1323
        %vm1526 = vcmp.lt.f32.partialorder %v1525, 0.0004427343
        %v1527 = vsel %vm1526, %v1524, %v1521
        %v1528 = vadd.f32 %v1325, 1.0
        %v1529 = vlog2.pop %v1528
        %v1530 = vmul.f32 %v1529, 0.6931472
        %v1531 = vmul.f32 -0.5, %v1325
        %v1532 = vadd.f32 %v1531, 1.0
        %v1533 = vmul.f32 %v1532, %v1325
        %v1534 = vand.u32 2147483647, %v1325
        %vm1535 = vcmp.lt.f32.partialorder %v1534, 0.0004427343
        %v1536 = vsel %vm1535, %v1533, %v1530
        %v1537 = vadd.f32 %v1327, 1.0
        %v1538 = vlog2.pop %v1537
        %v1539 = vmul.f32 %v1538, 0.6931472
        %v1540 = vmul.f32 -0.5, %v1327
        %v1541 = vadd.f32 %v1540, 1.0
        %v1542 = vmul.f32 %v1541, %v1327
        %v1543 = vand.u32 2147483647, %v1327
        %vm1544 = vcmp.lt.f32.partialorder %v1543, 0.0004427343
        %v1545 = vsel %vm1544, %v1542, %v1539
        %v1546 = vadd.f32 %v1329, 1.0
        %v1547 = vlog2.pop %v1546
        %v1548 = vmul.f32 %v1547, 0.6931472
        %v1549 = vmul.f32 -0.5, %v1329
        %v1550 = vadd.f32 %v1549, 1.0
        %v1551 = vmul.f32 %v1550, %v1329
        %v1552 = vand.u32 2147483647, %v1329
        %vm1553 = vcmp.lt.f32.partialorder %v1552, 0.0004427343
        %v1554 = vsel %vm1553, %v1551, %v1548
        %v1555 = vadd.f32 %v1331, 1.0
        %v1556 = vlog2.pop %v1555
        %v1557 = vmul.f32 %v1556, 0.6931472
        %v1558 = vmul.f32 -0.5, %v1331
        %v1559 = vadd.f32 %v1558, 1.0
        %v1560 = vmul.f32 %v1559, %v1331
        %v1561 = vand.u32 2147483647, %v1331
        %vm1562 = vcmp.lt.f32.partialorder %v1561, 0.0004427343
        %v1563 = vsel %vm1562, %v1560, %v1557
        %v1564 = vadd.f32 %v1333, 1.0
        %v1565 = vlog2.pop %v1564
        %v1566 = vmul.f32 %v1565, 0.6931472
        %v1567 = vmul.f32 -0.5, %v1333
        %v1568 = vadd.f32 %v1567, 1.0
        %v1569 = vmul.f32 %v1568, %v1333
        %v1570 = vand.u32 2147483647, %v1333
        %vm1571 = vcmp.lt.f32.partialorder %v1570, 0.0004427343
        %v1572 = vsel %vm1571, %v1569, %v1566
        %v1573 = vadd.f32 %v1335, 1.0
        %v1574 = vlog2.pop %v1573
        %v1575 = vmul.f32 %v1574, 0.6931472
        %v1576 = vmul.f32 -0.5, %v1335
        %v1577 = vadd.f32 %v1576, 1.0
        %v1578 = vmul.f32 %v1577, %v1335
        %v1579 = vand.u32 2147483647, %v1335
        %vm1580 = vcmp.lt.f32.partialorder %v1579, 0.0004427343
        %v1581 = vsel %vm1580, %v1578, %v1575
        %v1582 = vadd.f32 %v1337, 1.0
        %v1583 = vlog2.pop %v1582
        %v1584 = vmul.f32 %v1583, 0.6931472
        %v1585 = vmul.f32 -0.5, %v1337
        %v1586 = vadd.f32 %v1585, 1.0
        %v1587 = vmul.f32 %v1586, %v1337
        %v1588 = vand.u32 2147483647, %v1337
        %vm1589 = vcmp.lt.f32.partialorder %v1588, 0.0004427343
        %v1590 = vsel %vm1589, %v1587, %v1584
        %v1591 = vadd.f32 %v1339, 1.0
        %v1592 = vlog2.pop %v1591
        %v1593 = vmul.f32 %v1592, 0.6931472
        %v1594 = vmul.f32 -0.5, %v1339
        %v1595 = vadd.f32 %v1594, 1.0
        %v1596 = vmul.f32 %v1595, %v1339
        %v1597 = vand.u32 2147483647, %v1339
        %vm1598 = vcmp.lt.f32.partialorder %v1597, 0.0004427343
        %v1599 = vsel %vm1598, %v1596, %v1593
        %v1600 = vadd.f32 %v1341, 1.0
        %v1601 = vlog2.pop %v1600
        %v1602 = vmul.f32 %v1601, 0.6931472
        %v1603 = vmul.f32 -0.5, %v1341
        %v1604 = vadd.f32 %v1603, 1.0
        %v1605 = vmul.f32 %v1604, %v1341
        %v1606 = vand.u32 2147483647, %v1341
        %vm1607 = vcmp.lt.f32.partialorder %v1606, 0.0004427343
        %v1608 = vsel %vm1607, %v1605, %v1602
        %v1609 = vadd.f32 %v1343, 1.0
        %v1610 = vlog2.pop %v1609
        %v1611 = vmul.f32 %v1610, 0.6931472
        %v1612 = vmul.f32 -0.5, %v1343
        %v1613 = vadd.f32 %v1612, 1.0
        %v1614 = vmul.f32 %v1613, %v1343
        %v1615 = vand.u32 2147483647, %v1343
        %vm1616 = vcmp.lt.f32.partialorder %v1615, 0.0004427343
        %v1617 = vsel %vm1616, %v1614, %v1611
        %v1618 = vadd.f32 %v1345, 1.0
        %v1619 = vlog2.pop %v1618
        %v1620 = vmul.f32 %v1619, 0.6931472
        %v1621 = vmul.f32 -0.5, %v1345
        %v1622 = vadd.f32 %v1621, 1.0
        %v1623 = vmul.f32 %v1622, %v1345
        %v1624 = vand.u32 2147483647, %v1345
        %vm1625 = vcmp.lt.f32.partialorder %v1624, 0.0004427343
        %v1626 = vsel %vm1625, %v1623, %v1620
        %v1627 = vadd.f32 %v1347, 1.0
        %v1628 = vlog2.pop %v1627
        %v1629 = vmul.f32 %v1628, 0.6931472
        %v1630 = vmul.f32 -0.5, %v1347
        %v1631 = vadd.f32 %v1630, 1.0
        %v1632 = vmul.f32 %v1631, %v1347
        %v1633 = vand.u32 2147483647, %v1347
        %vm1634 = vcmp.lt.f32.partialorder %v1633, 0.0004427343
        %v1635 = vsel %vm1634, %v1632, %v1629
        %v1636 = vadd.f32 %v1188, %v1356
        %v1637 = vadd.f32 %v1189, %v1365
        %v1638 = vadd.f32 %v1190, %v1374
        %v1639 = vadd.f32 %v1191, %v1383
        %v1640 = vadd.f32 %v1192, %v1392
        %v1641 = vadd.f32 %v1193, %v1401
        %v1642 = vadd.f32 %v1194, %v1410
        %v1643 = vadd.f32 %v1195, %v1419
        %v1644 = vadd.f32 %v1196, %v1428
        %v1645 = vadd.f32 %v1197, %v1437
        %v1646 = vadd.f32 %v1198, %v1446
        %v1647 = vadd.f32 %v1199, %v1455
        %v1648 = vadd.f32 %v1200, %v1464
        %v1649 = vadd.f32 %v1201, %v1473
        %v1650 = vadd.f32 %v1202, %v1482
        %v1651 = vadd.f32 %v1203, %v1491
        %v1652 = vadd.f32 %v1204, %v1500
        %v1653 = vadd.f32 %v1205, %v1509
        %v1654 = vadd.f32 %v1206, %v1518
        %v1655 = vadd.f32 %v1207, %v1527
        %v1656 = vadd.f32 %v1208, %v1536
        %v1657 = vadd.f32 %v1209, %v1545
        %v1658 = vadd.f32 %v1210, %v1554
        %v1659 = vadd.f32 %v1211, %v1563
        %v1660 = vadd.f32 %v1212, %v1572
        %v1661 = vadd.f32 %v1213, %v1581
        %v1662 = vadd.f32 %v1214, %v1590
        %v1663 = vadd.f32 %v1215, %v1599
        %v1664 = vadd.f32 %v1216, %v1608
        %v1665 = vadd.f32 %v1217, %v1617
        %v1666 = vadd.f32 %v1218, %v1626
        %v1667 = vadd.f32 %v1219, %v1635
        %1668 = vst [vmem:[%s309] sm:$0xff] %v1636
        %1669 = vst [vmem:[%s309 + $0x8] sm:$0xff] %v1637
        %1670 = vst [vmem:[%s309 + $0x10] sm:$0xff] %v1638
        %1671 = vst [vmem:[%s309 + $0x18] sm:$0xff] %v1639
        %1672 = vst [vmem:[%s309 + $0x20] sm:$0xff] %v1640
        %1673 = vst [vmem:[%s309 + $0x28] sm:$0xff] %v1641
        %1674 = vst [vmem:[%s309 + $0x30] sm:$0xff] %v1642
        %1675 = vst [vmem:[%s309 + $0x38] sm:$0xff] %v1643
        %1676 = vst [vmem:[%s309 + $0x40] sm:$0xff] %v1644
        %1677 = vst [vmem:[%s309 + $0x48] sm:$0xff] %v1645
        %1678 = vst [vmem:[%s309 + $0x50] sm:$0xff] %v1646
        %1679 = vst [vmem:[%s309 + $0x58] sm:$0xff] %v1647
        %1680 = vst [vmem:[%s309 + $0x60] sm:$0xff] %v1648
        %1681 = vst [vmem:[%s309 + $0x68] sm:$0xff] %v1649
        %1682 = vst [vmem:[%s309 + $0x70] sm:$0xff] %v1650
        %1683 = vst [vmem:[%s309 + $0x78] sm:$0xff] %v1651
        %1684 = vst [vmem:[%s309 + $0x80] sm:$0xff] %v1652
        %1685 = vst [vmem:[%s309 + $0x88] sm:$0xff] %v1653
        %1686 = vst [vmem:[%s309 + $0x90] sm:$0xff] %v1654
        %1687 = vst [vmem:[%s309 + $0x98] sm:$0xff] %v1655
        %1688 = vst [vmem:[%s309 + $0xa0] sm:$0xff] %v1656
        %1689 = vst [vmem:[%s309 + $0xa8] sm:$0xff] %v1657
        %1690 = vst [vmem:[%s309 + $0xb0] sm:$0xff] %v1658
        %1691 = vst [vmem:[%s309 + $0xb8] sm:$0xff] %v1659
        %1692 = vst [vmem:[%s309 + $0xc0] sm:$0xff] %v1660
        %1693 = vst [vmem:[%s309 + $0xc8] sm:$0xff] %v1661
        %1694 = vst [vmem:[%s309 + $0xd0] sm:$0xff] %v1662
        %1695 = vst [vmem:[%s309 + $0xd8] sm:$0xff] %v1663
        %1696 = vst [vmem:[%s309 + $0xe0] sm:$0xff] %v1664
        %1697 = vst [vmem:[%s309 + $0xe8] sm:$0xff] %v1665
        %1698 = vst [vmem:[%s309 + $0xf0] sm:$0xff] %v1666
        %1699 = vst [vmem:[%s309 + $0xf8] sm:$0xff] %v1667
        %s1700 = sand.u32 %s146, 1
        %s1701 = scalar_lea.sflag [#allocation4], %s1700
        %s1702 = sand.u32 %s146, 1
        %s1703 = smul.addr %s1702, 256
        %s1704 = scalar_lea.vmem [#allocation8], %s1703
        %s1705 = sand.u32 %s172, 1
        %s1706 = scalar_lea.sflag [#allocation10], %s1705
        %s1707 = sand.u32 %s172, 1
        %s1708 = smul.addr %s1707, 256
        %s1709 = scalar_lea.vmem [#allocation9], %s1708
        // Predicated region
        $region53: #{fully_factorized_likelihood.1} parent=39 // pred_check
          %p1710 = pneg %p156
        $region54: #{fully_factorized_likelihood.1} parent=39 // pred_check_branch
          %1712 = sbr.rel (%p1710) target = $region56
        $region55: #{fully_factorized_likelihood.1} parent=39 // pred_region
          %s1713 = smul.u32 32, %s28
          %s1715 = ssub.s32 4096, 4096
          %1716 = vsyncadd %s1701, %s1715
          %s1717 = smul.addr %s1713, 128
          %s1718 = scalar_lea.hbm %s5, %s1717
          %s1719 = sshll.u32 %s1704, 4
          %s1720 = int_to_ptr.vmem [resolvable:$true] %s1719
          %1725 = dma.vmem_to_hbm [thread:$0]  %s1720, 4096, %s1718, %s1701, 128, 128, 8
        $region56: #{fully_factorized_likelihood.1} parent=39 // pred_fallthru
          _
        // Predicated region
        $region57: #{fully_factorized_likelihood.1} parent=39 // pred_check
          %p1726 = pneg %p182
        $region58: #{fully_factorized_likelihood.1} parent=39 // pred_check_branch
          %1728 = sbr.rel (%p1726) target = $region60
        $region59: #{fully_factorized_likelihood.1} parent=39 // pred_region
          %s1729 = smul.u32 32, %s28
          %s1731 = ssub.s32 4096, 4096
          %1732 = vsyncadd %s1706, %s1731
          %s1733 = smul.addr %s1729, 128
          %s1734 = scalar_lea.hbm %s6, %s1733
          %s1735 = sshll.u32 %s1709, 4
          %s1736 = int_to_ptr.vmem [resolvable:$true] %s1735
          %1741 = dma.vmem_to_hbm [thread:$0]  %s1736, 4096, %s1734, %s1706, 128, 128, 8
        $region60: #{fully_factorized_likelihood.1} parent=39 // pred_fallthru
          _
      $region40: #{fully_factorized_likelihood.1} parent=5 // pred_fallthru
        _
      %p1742 = scmp.le.s32.totalorder 2, %s23
      // Predicated region
      $region61: #{fully_factorized_likelihood.1} parent=5 // pred_check
        %p1743 = pneg %p1742
      $region62: #{fully_factorized_likelihood.1} parent=5 // pred_check_branch
        %1745 = sbr.rel (%p1743) target = $region64
      $region63: #{fully_factorized_likelihood.1} parent=5 // pred_region
        %s1746 = ssub.s32 %s23, 2
        // Predicated region
        $region65: #{fully_factorized_likelihood.1} parent=63 // pred_check
          %p1747 = pneg %p162
        $region66: #{fully_factorized_likelihood.1} parent=63 // pred_check_branch
          %1749 = sbr.rel (%p1747) target = $region68
        $region67: #{fully_factorized_likelihood.1} parent=63 // pred_region
          %s1750 = sand.u32 %s147, 1
          %s1751 = scalar_lea.sflag [#allocation4], %s1750
          %s1752 = sand.u32 %s147, 1
          %s1753 = smul.addr %s1752, 256
          %s1754 = scalar_lea.vmem [#allocation8], %s1753
          %1755 = dma.done %s1751, 4096
        $region68: #{fully_factorized_likelihood.1} parent=63 // pred_fallthru
          _
        // Predicated region
        $region69: #{fully_factorized_likelihood.1} parent=63 // pred_check
          %p1756 = pneg %p188
        $region70: #{fully_factorized_likelihood.1} parent=63 // pred_check_branch
          %1758 = sbr.rel (%p1756) target = $region72
        $region71: #{fully_factorized_likelihood.1} parent=63 // pred_region
          %s1759 = sand.u32 %s173, 1
          %s1760 = scalar_lea.sflag [#allocation10], %s1759
          %s1761 = sand.u32 %s173, 1
          %s1762 = smul.addr %s1761, 256
          %s1763 = scalar_lea.vmem [#allocation9], %s1762
          %1764 = dma.done %s1760, 4096
        $region72: #{fully_factorized_likelihood.1} parent=63 // pred_fallthru
          _
      $region64: #{fully_factorized_likelihood.1} parent=5 // pred_fallthru
        _
    $region6: #{fully_factorized_likelihood.1} parent=1 // loop_footer
      %s27 = sadd.s32 1, %s23
    $region7: #{fully_factorized_likelihood.1} parent=1 // loop_footer_branch
      %22 = sbr.rel target = $region3
    $region8: #{fully_factorized_likelihood.1} parent=1 // loop_exit
      _
    %1765 = vsyncpa [#allocation3], 1
    %s1766 = scalar_lea.sflag [#allocation3], 1
    %1767 = vsyncpa %s1766, 1
    %1768 = vsyncpa [#allocation6], 1
    %1769 = vsyncpa [#allocation4], 1
    %s1770 = scalar_lea.sflag [#allocation4], 1
    %1771 = vsyncpa %s1770, 1
    %1772 = vsyncpa [#allocation10], 1
    %s1773 = scalar_lea.sflag [#allocation10], 1
    %1774 = vsyncpa %s1773, 1

</llo_original>
